<compile_context>
chip_gen: v7x
topology: tpu7x:2x2x1
jax: 0.10.0
libtpu: 0.0.40
codegen_flags: <defaults>
</compile_context>

<pallas_src>
import functools

import jax
import jax.numpy as jnp
import numpy as np
from jax.experimental import pallas as pl
from jax.experimental.pallas import tpu as pltpu

EPS = 1e-5          # nn.InstanceNorm2d default eps
NEG_SLOPE = 0.01    # LeakyReLU(0.01)
LANE_PAD = 128      # lane-aligned zero halo on each side of the flattened image


def _resblock_kernel(mask_ref, x_ref, w1_ref, g1_ref, b1_ref, w2_ref, g2_ref, b2_ref,
                     out_ref, pad_ref, *, W, HW, R):
    # Re-zero the halo bands every step: cheap, and megacore-safe even when the
    # parallel batch axis is split across TensorCores (a program_id==0-only init would
    # leave the second core's scratch uninitialized).
    zeros_pad = jnp.zeros((R, LANE_PAD), jnp.float32)
    pad_ref[:, :LANE_PAD] = zeros_pad
    pad_ref[:, LANE_PAD + HW:LANE_PAD + HW + LANE_PAD] = zeros_pad

    pm_l = mask_ref[0:1, :]          # (1, HW+2P) valid-left mask, padded-lane frame
    pm_r = mask_ref[1:2, :]          # (1, HW+2P) valid-right mask

    def conv3x3(a, w_ref):
        # a: (R, HW) f32.  w_ref: (R, 9*R) bf16 block-diagonal packed taps.
        pad_ref[:, LANE_PAD:LANE_PAD + HW] = a
        aw = pad_ref[...]                         # (R, HW+2P) f32, zero halo
        aw_l = aw * pm_l                          # pre-masked buffers: 2 muls per conv
        aw_r = aw * pm_r
        taps = []
        for kh in range(3):
            for kw in range(3):
                src = aw_l if kw == 0 else (aw_r if kw == 2 else aw)
                off = LANE_PAD + (kh - 1) * W + (kw - 1)
                taps.append(src[:, off:off + HW])
        # 8-row-aligned f32 concat -> single bf16 cast -> one K=9*R MXU contraction.
        stacked = jnp.concatenate(taps, axis=0).astype(jnp.bfloat16)   # (9*R, HW)
        return jnp.dot(w_ref[...], stacked, preferred_element_type=jnp.float32)

    def inst_norm(a, g_ref, b_ref):
        # Two-pass mean / centered variance in f32; each row is one (image, channel).
        mean = jnp.mean(a, axis=1, keepdims=True)
        c = a - mean
        var = jnp.mean(c * c, axis=1, keepdims=True)
        inv = jax.lax.rsqrt(var + EPS)
        return c * (inv * g_ref[...]) + b_ref[...]

    h = conv3x3(x_ref[0], w1_ref)
    h = inst_norm(h, g1_ref, b1_ref)
    h = jnp.where(h >= 0, h, NEG_SLOPE * h)          # LeakyReLU(0.01)
    # TODO(synk): nn.Dropout() is stochastic in train mode; eval-mode identity here.
    y = conv3x3(h, w2_ref)
    y = inst_norm(y, g2_ref, b2_ref)
    out_ref[0] = x_ref[0] + y                        # re-read x: shorter live range


def _pick_batch_tile(B, C):
    # Pack images along sublanes until bt*C fills the 8-row f32 sublane tile.
    # (For B >= 2*bt the parallel batch grid also splits across v7x's 2 TensorCores.)
    cap = max(1, 8 // C)
    bt = 1
    for d in range(1, min(cap, B) + 1):
        if B % d == 0:
            bt = d
    return bt


def _pack_weights(w_hwio, C, bt):
    # HWIO (3,3,Cin,Cout) -> block-diagonal (bt*Cout, 9*bt*Cin) matrix so ONE MXU
    # contraction computes the 3x3 conv for bt sublane-packed images at once.
    w_taps = w_hwio.reshape(9, C, C)                       # (tap, ci, co)
    w_ocic = jnp.transpose(w_taps, (0, 2, 1))              # (tap, co, ci)
    eye = jnp.eye(bt, dtype=w_hwio.dtype)
    wp = jnp.einsum('bd,toc->botdc', eye, w_ocic)          # (bt, co, tap, bt, ci)
    return wp.reshape(bt * C, 9 * bt * C).astype(jnp.bfloat16)


def _padded_col_masks(H, W):
    # Column-validity masks expressed in the padded-lane frame: a tap with lane shift
    # (kh-1)*W +/- 1 reads padded lane q = LANE_PAD + off + p, and its validity only
    # depends on (q - LANE_PAD) mod W, so one mask per horizontal direction suffices
    # for all three kh rows.
    pw = H * W + 2 * LANE_PAD
    colq = (np.arange(pw) - LANE_PAD) % W
    pm_l = (colq != W - 1).astype(np.float32)              # kw = 0 taps (dw = -1)
    pm_r = (colq != 0).astype(np.float32)                  # kw = 2 taps (dw = +1)
    return jnp.asarray(np.stack([pm_l, pm_r], axis=0))     # (2, pw)


def residual_block(x_nchw, w1_hwio, g1, b1, w2_hwio, g2, b2):
    """x_nchw: (B, C, H, W) f32.  w*_hwio: (3, 3, Cin, Cout).  g*/b*: (C,) affine."""
    B, C, H, W = x_nchw.shape
    HW = H * W
    assert w1_hwio.shape == (3, 3, C, C) and w2_hwio.shape == (3, 3, C, C), \
        "residual add requires dim_in == dim_out"
    assert HW % 128 == 0, "flattened spatial dim must be a multiple of 128 lanes"

    bt = _pick_batch_tile(B, C)          # images packed per grid step
    R = bt * C                           # rows per packed block
    nb = B // bt                         # grid length (parallel axis)
    PW = HW + 2 * LANE_PAD

    # Free reshape: NCHW -> (nb, bt*C, H*W); spatial extent sits in the lane dim.
    x_blocks = x_nchw.reshape(nb, R, HW)

    w1p = _pack_weights(w1_hwio, C, bt)
    w2p = _pack_weights(w2_hwio, C, bt)
    g1p = jnp.tile(g1, (bt,)).reshape(R, 1)
    b1p = jnp.tile(b1, (bt,)).reshape(R, 1)
    g2p = jnp.tile(g2, (bt,)).reshape(R, 1)
    b2p = jnp.tile(b2, (bt,)).reshape(R, 1)
    masks = _padded_col_masks(H, W)                        # (2, PW) f32

    kernel = functools.partial(_resblock_kernel, W=W, HW=HW, R=R)

    cost = pl.CostEstimate(
        flops=int(4 * 9 * bt * B * C * C * HW),            # two packed-conv dots
        transcendentals=int(2 * B * C),                    # rsqrt per row per norm
        bytes_accessed=int(2 * B * C * HW * 4 + 2 * R * 9 * R * 2
                           + 4 * R * 4 + 2 * PW * 4),
    )

    def _run(single_buffer_consts):
        def const_spec(shape):
            idx = lambda i: (0,) * len(shape)
            if single_buffer_consts:
                # Constant index map -> double buffering buys nothing; saves VMEM on
                # v7x at production channel counts.
                return pl.BlockSpec(shape, idx, pipeline_mode=pl.Buffered(1))
            return pl.BlockSpec(shape, idx)

        grid_spec = pltpu.PrefetchScalarGridSpec(
            num_scalar_prefetch=0,
            grid=(nb,),
            in_specs=[
                const_spec((2, PW)),                             # padded column masks
                pl.BlockSpec((1, R, HW), lambda i: (i, 0, 0)),   # x block
                const_spec((R, 9 * R)),                          # conv1 packed taps
                const_spec((R, 1)),                              # gamma1
                const_spec((R, 1)),                              # beta1
                const_spec((R, 9 * R)),                          # conv2 packed taps
                const_spec((R, 1)),                              # gamma2
                const_spec((R, 1)),                              # beta2
            ],
            out_specs=pl.BlockSpec((1, R, HW), lambda i: (i, 0, 0)),
            scratch_shapes=[pltpu.VMEM((R, PW), jnp.float32)],   # persistent halo buf
        )
        return pl.pallas_call(
            kernel,
            out_shape=jax.ShapeDtypeStruct((nb, R, HW), jnp.float32),
            grid_spec=grid_spec,
            compiler_params=pltpu.CompilerParams(
                dimension_semantics=("parallel",),
                vmem_limit_bytes=32 * 1024 * 1024),
            cost_estimate=cost,
        )(masks, x_blocks, w1p, g1p, b1p, w2p, g2p, b2p)

    try:
        out_blocks = _run(True)           # single-buffered constant-index inputs
    except Exception:
        out_blocks = _run(False)          # Pallas without pipeline_mode / Buffered(1)

    return out_blocks.reshape(B, C, H, W)


def _reference(x, w1, g1, b1, w2, g2, b2):
    """Plain-JAX NCHW reference of ResidualBlock.forward (eval-mode dropout).
    Mirrors the kernel's precision policy: bf16 conv operands, f32 accumulation,
    f32 InstanceNorm / LeakyReLU / residual."""
    def conv(a, w):
        return jax.lax.conv_general_dilated(
            a.astype(jnp.bfloat16), w.astype(jnp.bfloat16), (1, 1), "SAME",
            dimension_numbers=("NCHW", "HWIO", "NCHW"),
            preferred_element_type=jnp.float32)

    def inorm(a, g, b):
        m = jnp.mean(a, axis=(2, 3), keepdims=True)
        v = jnp.mean((a - m) ** 2, axis=(2, 3), keepdims=True)
        return ((a - m) * jax.lax.rsqrt(v + EPS) * g.reshape(1, -1, 1, 1)
                + b.reshape(1, -1, 1, 1))

    h = conv(x, w1)
    h = inorm(h, g1, b1)
    h = jnp.where(h >= 0, h, NEG_SLOPE * h)
    h = conv(h, w2)
    h = inorm(h, g2, b2)
    return x + h


if __name__ == "__main__":
    B, C, H, W = 2, 4, 16, 16          # dim_in == dim_out == 4
    key = jax.random.PRNGKey(0)
    kx, kw1, kw2, kg1, kb1, kg2, kb2 = jax.random.split(key, 7)

    # Input in PyTorch's native NCHW layout (no transposes needed).
    x = jax.random.normal(kx, (B, C, H, W), dtype=jnp.float32)

    # Deterministic synthetic parameters (HWIO conv weights, per-channel affine).
    w1 = 0.1 * jax.random.normal(kw1, (3, 3, C, C), dtype=jnp.float32)
    w2 = 0.1 * jax.random.normal(kw2, (3, 3, C, C), dtype=jnp.float32)
    g1 = 1.0 + 0.1 * jax.random.normal(kg1, (C,), dtype=jnp.float32)
    b1 = 0.1 * jax.random.normal(kb1, (C,), dtype=jnp.float32)
    g2 = 1.0 + 0.1 * jax.random.normal(kg2, (C,), dtype=jnp.float32)
    b2 = 0.1 * jax.random.normal(kb2, (C,), dtype=jnp.float32)

    out = jax.block_until_ready(residual_block(x, w1, g1, b1, w2, g2, b2))
    ref = jax.block_until_ready(_reference(x, w1, g1, b1, w2, g2, b2))
    np.testing.assert_allclose(np.asarray(out), np.asarray(ref), rtol=2e-3, atol=2e-3)

    print("KERNEL_OK")
</pallas_src>

<mosaic_0001>
module attributes {stable_mosaic.version = 11 : i64} {
  func.func @_resblock_kernel(%arg0: i32, %arg1: memref<2x512xf32, #tpu.memory_space<vmem>>, %arg2: memref<1x8x256xf32, #tpu.memory_space<vmem>>, %arg3: memref<8x72xbf16, #tpu.memory_space<vmem>>, %arg4: memref<8x1xf32, #tpu.memory_space<vmem>>, %arg5: memref<8x1xf32, #tpu.memory_space<vmem>>, %arg6: memref<8x72xbf16, #tpu.memory_space<vmem>>, %arg7: memref<8x1xf32, #tpu.memory_space<vmem>>, %arg8: memref<8x1xf32, #tpu.memory_space<vmem>>, %arg9: memref<1x8x256xf32, #tpu.memory_space<vmem>>, %arg10: memref<8x512xf32, #tpu.memory_space<vmem>>) attributes {dimension_semantics = [#tpu.dimension_semantics<parallel>], iteration_bounds = array<i64: 1>, scalar_prefetch = 0 : i64, scratch_operands = 1 : i64, tpu.core_type = #tpu.core_type<tc>, window_params = [{pipeline_mode = #tpu.pipeline_mode<synchronous>, transform_indices = @transform_0, window_bounds = array<i64: 2, 512>}, {transform_indices = @transform_1, window_bounds = array<i64: 1, 8, 256>}, {pipeline_mode = #tpu.pipeline_mode<synchronous>, transform_indices = @transform_2, window_bounds = array<i64: 8, 72>}, {pipeline_mode = #tpu.pipeline_mode<synchronous>, transform_indices = @transform_3, window_bounds = array<i64: 8, 1>}, {pipeline_mode = #tpu.pipeline_mode<synchronous>, transform_indices = @transform_4, window_bounds = array<i64: 8, 1>}, {pipeline_mode = #tpu.pipeline_mode<synchronous>, transform_indices = @transform_5, window_bounds = array<i64: 8, 72>}, {pipeline_mode = #tpu.pipeline_mode<synchronous>, transform_indices = @transform_6, window_bounds = array<i64: 8, 1>}, {pipeline_mode = #tpu.pipeline_mode<synchronous>, transform_indices = @transform_7, window_bounds = array<i64: 8, 1>}, {transform_indices = @transform_8, window_bounds = array<i64: 1, 8, 256>}]} {
    %cst = arith.constant 0.000000e+00 : f32
    %0 = vector.broadcast %cst : f32 to vector<8x128xf32>
    %c0 = arith.constant 0 : index
    %c0_0 = arith.constant 0 : index
    %1 = vector.load %arg10[%c0, %c0_0] : memref<8x512xf32, #tpu.memory_space<vmem>>, vector<8x128xf32>
    tpu.vector_store %arg10[%c0, %c0_0], %0 {strides = array<i32>} : memref<8x512xf32, #tpu.memory_space<vmem>>, vector<8x128xf32>,
    %c0_1 = arith.constant 0 : index
    %c384 = arith.constant 384 : index
    %2 = vector.load %arg10[%c0_1, %c384] : memref<8x512xf32, #tpu.memory_space<vmem>>, vector<8x128xf32>
    tpu.vector_store %arg10[%c0_1, %c384], %0 {strides = array<i32>} : memref<8x512xf32, #tpu.memory_space<vmem>>, vector<8x128xf32>,
    %c0_2 = arith.constant 0 : index
    %c0_3 = arith.constant 0 : index
    %3 = vector.load %arg1[%c0_2, %c0_3] : memref<2x512xf32, #tpu.memory_space<vmem>>, vector<1x512xf32>
    %c1 = arith.constant 1 : index
    %c0_4 = arith.constant 0 : index
    %4 = vector.load %arg1[%c1, %c0_4] : memref<2x512xf32, #tpu.memory_space<vmem>>, vector<1x512xf32>
    %c0_5 = arith.constant 0 : index
    %c0_6 = arith.constant 0 : index
    %c0_7 = arith.constant 0 : index
    %5 = vector.load %arg2[%c0_5, %c0_6, %c0_7] : memref<1x8x256xf32, #tpu.memory_space<vmem>>, vector<1x8x256xf32>
    %6 = vector.shape_cast %5 : vector<1x8x256xf32> to vector<8x256xf32>
    %c0_8 = arith.constant 0 : index
    %c128 = arith.constant 128 : index
    %7 = vector.load %arg10[%c0_8, %c128] : memref<8x512xf32, #tpu.memory_space<vmem>>, vector<8x256xf32>
    tpu.vector_store %arg10[%c0_8, %c128], %6 {strides = array<i32>} : memref<8x512xf32, #tpu.memory_space<vmem>>, vector<8x256xf32>,
    %c0_9 = arith.constant 0 : index
    %c0_10 = arith.constant 0 : index
    %8 = vector.load %arg10[%c0_9, %c0_10] : memref<8x512xf32, #tpu.memory_space<vmem>>, vector<8x512xf32>
    %9 = vector.broadcast %3 : vector<1x512xf32> to vector<8x512xf32>
    %10 = arith.mulf %8, %9 : vector<8x512xf32>
    %11 = vector.broadcast %4 : vector<1x512xf32> to vector<8x512xf32>
    %12 = arith.mulf %8, %11 : vector<8x512xf32>
    %13 = vector.extract_strided_slice %10 {offsets = [0, 111], sizes = [8, 256], strides = [1, 1]} : vector<8x512xf32> to vector<8x256xf32>
    %14 = vector.extract_strided_slice %8 {offsets = [0, 112], sizes = [8, 256], strides = [1, 1]} : vector<8x512xf32> to vector<8x256xf32>
    %15 = vector.extract_strided_slice %12 {offsets = [0, 113], sizes = [8, 256], strides = [1, 1]} : vector<8x512xf32> to vector<8x256xf32>
    %16 = vector.extract_strided_slice %10 {offsets = [0, 127], sizes = [8, 256], strides = [1, 1]} : vector<8x512xf32> to vector<8x256xf32>
    %17 = vector.extract_strided_slice %8 {offsets = [0, 128], sizes = [8, 256], strides = [1, 1]} : vector<8x512xf32> to vector<8x256xf32>
    %18 = vector.extract_strided_slice %12 {offsets = [0, 129], sizes = [8, 256], strides = [1, 1]} : vector<8x512xf32> to vector<8x256xf32>
    %19 = vector.extract_strided_slice %10 {offsets = [0, 143], sizes = [8, 256], strides = [1, 1]} : vector<8x512xf32> to vector<8x256xf32>
    %20 = vector.extract_strided_slice %8 {offsets = [0, 144], sizes = [8, 256], strides = [1, 1]} : vector<8x512xf32> to vector<8x256xf32>
    %21 = vector.extract_strided_slice %12 {offsets = [0, 145], sizes = [8, 256], strides = [1, 1]} : vector<8x512xf32> to vector<8x256xf32>
    %22 = tpu.concatenate %13, %14, %15, %16, %17, %18, %19, %20, %21 in 0 : vector<8x256xf32>, vector<8x256xf32>, vector<8x256xf32>, vector<8x256xf32>, vector<8x256xf32>, vector<8x256xf32>, vector<8x256xf32>, vector<8x256xf32>, vector<8x256xf32> -> vector<72x256xf32>
    %23 = arith.truncf %22 : vector<72x256xf32> to vector<72x256xbf16>
    %c0_11 = arith.constant 0 : index
    %c0_12 = arith.constant 0 : index
    %24 = vector.load %arg3[%c0_11, %c0_12] : memref<8x72xbf16, #tpu.memory_space<vmem>>, vector<8x72xbf16>
    %cst_13 = arith.constant dense<0.000000e+00> : vector<8x256xf32>
    %25 = tpu.matmul %24, %23, %cst_13 {dimension_numbers = #tpu.dot_dimension_numbers<[1], [0], [0], [1], [0, 0, 1, 1], [], []>} : vector<8x72xbf16>, vector<72x256xbf16>, vector<8x256xf32> -> vector<8x256xf32>
    %cst_14 = arith.constant dense<0.000000e+00> : vector<8xf32>
    %26 = vector.multi_reduction <add>, %25, %cst_14 [1] : vector<8x256xf32> to vector<8xf32>
    %27 = vector.shape_cast %26 : vector<8xf32> to vector<8x1xf32>
    %cst_15 = arith.constant 2.560000e+02 : f32
    %28 = vector.broadcast %cst_15 : f32 to vector<8x1xf32>
    %29 = arith.divf %27, %28 : vector<8x1xf32>
    %30 = vector.broadcast %29 : vector<8x1xf32> to vector<8x256xf32>
    %31 = arith.subf %25, %30 : vector<8x256xf32>
    %32 = arith.mulf %31, %31 : vector<8x256xf32>
    %cst_16 = arith.constant dense<0.000000e+00> : vector<8xf32>
    %33 = vector.multi_reduction <add>, %32, %cst_16 [1] : vector<8x256xf32> to vector<8xf32>
    %34 = vector.shape_cast %33 : vector<8xf32> to vector<8x1xf32>
    %cst_17 = arith.constant 2.560000e+02 : f32
    %35 = vector.broadcast %cst_17 : f32 to vector<8x1xf32>
    %36 = arith.divf %34, %35 : vector<8x1xf32>
    %cst_18 = arith.constant 9.99999974E-6 : f32
    %37 = vector.broadcast %cst_18 : f32 to vector<8x1xf32>
    %38 = arith.addf %36, %37 : vector<8x1xf32>
    %39 = math.rsqrt %38 : vector<8x1xf32>
    %c0_19 = arith.constant 0 : index
    %c0_20 = arith.constant 0 : index
    %40 = vector.load %arg4[%c0_19, %c0_20] : memref<8x1xf32, #tpu.memory_space<vmem>>, vector<8x1xf32>
    %41 = arith.mulf %39, %40 : vector<8x1xf32>
    %42 = vector.broadcast %41 : vector<8x1xf32> to vector<8x256xf32>
    %43 = arith.mulf %31, %42 : vector<8x256xf32>
    %c0_21 = arith.constant 0 : index
    %c0_22 = arith.constant 0 : index
    %44 = vector.load %arg5[%c0_21, %c0_22] : memref<8x1xf32, #tpu.memory_space<vmem>>, vector<8x1xf32>
    %45 = vector.broadcast %44 : vector<8x1xf32> to vector<8x256xf32>
    %46 = arith.addf %43, %45 : vector<8x256xf32>
    %cst_23 = arith.constant 0.000000e+00 : f32
    %47 = vector.broadcast %cst_23 : f32 to vector<8x256xf32>
    %48 = arith.cmpf oge, %46, %47 : vector<8x256xf32>
    %cst_24 = arith.constant 0.00999999977 : f32
    %49 = vector.broadcast %cst_24 : f32 to vector<8x256xf32>
    %50 = arith.mulf %49, %46 : vector<8x256xf32>
    %51 = arith.select %48, %46, %50 : vector<8x256xi1>, vector<8x256xf32>
    %c0_25 = arith.constant 0 : index
    %c128_26 = arith.constant 128 : index
    %52 = vector.load %arg10[%c0_25, %c128_26] : memref<8x512xf32, #tpu.memory_space<vmem>>, vector<8x256xf32>
    tpu.vector_store %arg10[%c0_25, %c128_26], %51 {strides = array<i32>} : memref<8x512xf32, #tpu.memory_space<vmem>>, vector<8x256xf32>,
    %c0_27 = arith.constant 0 : index
    %c0_28 = arith.constant 0 : index
    %53 = vector.load %arg10[%c0_27, %c0_28] : memref<8x512xf32, #tpu.memory_space<vmem>>, vector<8x512xf32>
    %54 = vector.broadcast %3 : vector<1x512xf32> to vector<8x512xf32>
    %55 = arith.mulf %53, %54 : vector<8x512xf32>
    %56 = vector.broadcast %4 : vector<1x512xf32> to vector<8x512xf32>
    %57 = arith.mulf %53, %56 : vector<8x512xf32>
    %58 = vector.extract_strided_slice %55 {offsets = [0, 111], sizes = [8, 256], strides = [1, 1]} : vector<8x512xf32> to vector<8x256xf32>
    %59 = vector.extract_strided_slice %53 {offsets = [0, 112], sizes = [8, 256], strides = [1, 1]} : vector<8x512xf32> to vector<8x256xf32>
    %60 = vector.extract_strided_slice %57 {offsets = [0, 113], sizes = [8, 256], strides = [1, 1]} : vector<8x512xf32> to vector<8x256xf32>
    %61 = vector.extract_strided_slice %55 {offsets = [0, 127], sizes = [8, 256], strides = [1, 1]} : vector<8x512xf32> to vector<8x256xf32>
    %62 = vector.extract_strided_slice %53 {offsets = [0, 128], sizes = [8, 256], strides = [1, 1]} : vector<8x512xf32> to vector<8x256xf32>
    %63 = vector.extract_strided_slice %57 {offsets = [0, 129], sizes = [8, 256], strides = [1, 1]} : vector<8x512xf32> to vector<8x256xf32>
    %64 = vector.extract_strided_slice %55 {offsets = [0, 143], sizes = [8, 256], strides = [1, 1]} : vector<8x512xf32> to vector<8x256xf32>
    %65 = vector.extract_strided_slice %53 {offsets = [0, 144], sizes = [8, 256], strides = [1, 1]} : vector<8x512xf32> to vector<8x256xf32>
    %66 = vector.extract_strided_slice %57 {offsets = [0, 145], sizes = [8, 256], strides = [1, 1]} : vector<8x512xf32> to vector<8x256xf32>
    %67 = tpu.concatenate %58, %59, %60, %61, %62, %63, %64, %65, %66 in 0 : vector<8x256xf32>, vector<8x256xf32>, vector<8x256xf32>, vector<8x256xf32>, vector<8x256xf32>, vector<8x256xf32>, vector<8x256xf32>, vector<8x256xf32>, vector<8x256xf32> -> vector<72x256xf32>
    %68 = arith.truncf %67 : vector<72x256xf32> to vector<72x256xbf16>
    %c0_29 = arith.constant 0 : index
    %c0_30 = arith.constant 0 : index
    %69 = vector.load %arg6[%c0_29, %c0_30] : memref<8x72xbf16, #tpu.memory_space<vmem>>, vector<8x72xbf16>
    %cst_31 = arith.constant dense<0.000000e+00> : vector<8x256xf32>
    %70 = tpu.matmul %69, %68, %cst_31 {dimension_numbers = #tpu.dot_dimension_numbers<[1], [0], [0], [1], [0, 0, 1, 1], [], []>} : vector<8x72xbf16>, vector<72x256xbf16>, vector<8x256xf32> -> vector<8x256xf32>
    %cst_32 = arith.constant dense<0.000000e+00> : vector<8xf32>
    %71 = vector.multi_reduction <add>, %70, %cst_32 [1] : vector<8x256xf32> to vector<8xf32>
    %72 = vector.shape_cast %71 : vector<8xf32> to vector<8x1xf32>
    %cst_33 = arith.constant 2.560000e+02 : f32
    %73 = vector.broadcast %cst_33 : f32 to vector<8x1xf32>
    %74 = arith.divf %72, %73 : vector<8x1xf32>
    %75 = vector.broadcast %74 : vector<8x1xf32> to vector<8x256xf32>
    %76 = arith.subf %70, %75 : vector<8x256xf32>
    %77 = arith.mulf %76, %76 : vector<8x256xf32>
    %cst_34 = arith.constant dense<0.000000e+00> : vector<8xf32>
    %78 = vector.multi_reduction <add>, %77, %cst_34 [1] : vector<8x256xf32> to vector<8xf32>
    %79 = vector.shape_cast %78 : vector<8xf32> to vector<8x1xf32>
    %cst_35 = arith.constant 2.560000e+02 : f32
    %80 = vector.broadcast %cst_35 : f32 to vector<8x1xf32>
    %81 = arith.divf %79, %80 : vector<8x1xf32>
    %cst_36 = arith.constant 9.99999974E-6 : f32
    %82 = vector.broadcast %cst_36 : f32 to vector<8x1xf32>
    %83 = arith.addf %81, %82 : vector<8x1xf32>
    %84 = math.rsqrt %83 : vector<8x1xf32>
    %c0_37 = arith.constant 0 : index
    %c0_38 = arith.constant 0 : index
    %85 = vector.load %arg7[%c0_37, %c0_38] : memref<8x1xf32, #tpu.memory_space<vmem>>, vector<8x1xf32>
    %86 = arith.mulf %84, %85 : vector<8x1xf32>
    %87 = vector.broadcast %86 : vector<8x1xf32> to vector<8x256xf32>
    %88 = arith.mulf %76, %87 : vector<8x256xf32>
    %c0_39 = arith.constant 0 : index
    %c0_40 = arith.constant 0 : index
    %89 = vector.load %arg8[%c0_39, %c0_40] : memref<8x1xf32, #tpu.memory_space<vmem>>, vector<8x1xf32>
    %90 = vector.broadcast %89 : vector<8x1xf32> to vector<8x256xf32>
    %91 = arith.addf %88, %90 : vector<8x256xf32>
    %c0_41 = arith.constant 0 : index
    %c0_42 = arith.constant 0 : index
    %c0_43 = arith.constant 0 : index
    %92 = vector.load %arg2[%c0_41, %c0_42, %c0_43] : memref<1x8x256xf32, #tpu.memory_space<vmem>>, vector<1x8x256xf32>
    %93 = vector.shape_cast %92 : vector<1x8x256xf32> to vector<8x256xf32>
    %94 = arith.addf %93, %91 : vector<8x256xf32>
    %c0_44 = arith.constant 0 : index
    %c0_45 = arith.constant 0 : index
    %c0_46 = arith.constant 0 : index
    %95 = vector.load %arg9[%c0_44, %c0_45, %c0_46] : memref<1x8x256xf32, #tpu.memory_space<vmem>>, vector<1x8x256xf32>
    %96 = vector.shape_cast %95 : vector<1x8x256xf32> to vector<8x256xf32>
    %97 = vector.shape_cast %94 : vector<8x256xf32> to vector<1x8x256xf32>
    tpu.vector_store %arg9[%c0_44, %c0_45, %c0_46], %97 {strides = array<i32>} : memref<1x8x256xf32, #tpu.memory_space<vmem>>, vector<1x8x256xf32>,
    return
  }
  func.func @transform_0(%arg0: i32) -> (i32, i32) {
    %c0_i32 = arith.constant 0 : i32
    %c0_i32_0 = arith.constant 0 : i32
    %c0_i32_1 = arith.constant 0 : i32
    return %c0_i32, %c0_i32_0 : i32, i32
  }
  func.func @transform_1(%arg0: i32) -> (i32, i32, i32) {
    %c0_i32 = arith.constant 0 : i32
    %c0_i32_0 = arith.constant 0 : i32
    %c0_i32_1 = arith.constant 0 : i32
    return %arg0, %c0_i32, %c0_i32_0 : i32, i32, i32
  }
  func.func @transform_2(%arg0: i32) -> (i32, i32) {
    %c0_i32 = arith.constant 0 : i32
    %c0_i32_0 = arith.constant 0 : i32
    %c0_i32_1 = arith.constant 0 : i32
    return %c0_i32, %c0_i32_0 : i32, i32
  }
  func.func @transform_3(%arg0: i32) -> (i32, i32) {
    %c0_i32 = arith.constant 0 : i32
    %c0_i32_0 = arith.constant 0 : i32
    %c0_i32_1 = arith.constant 0 : i32
    return %c0_i32, %c0_i32_0 : i32, i32
  }
  func.func @transform_4(%arg0: i32) -> (i32, i32) {
    %c0_i32 = arith.constant 0 : i32
    %c0_i32_0 = arith.constant 0 : i32
    %c0_i32_1 = arith.constant 0 : i32
    return %c0_i32, %c0_i32_0 : i32, i32
  }
  func.func @transform_5(%arg0: i32) -> (i32, i32) {
    %c0_i32 = arith.constant 0 : i32
    %c0_i32_0 = arith.constant 0 : i32
    %c0_i32_1 = arith.constant 0 : i32
    return %c0_i32, %c0_i32_0 : i32, i32
  }
  func.func @transform_6(%arg0: i32) -> (i32, i32) {
    %c0_i32 = arith.constant 0 : i32
    %c0_i32_0 = arith.constant 0 : i32
    %c0_i32_1 = arith.constant 0 : i32
    return %c0_i32, %c0_i32_0 : i32, i32
  }
  func.func @transform_7(%arg0: i32) -> (i32, i32) {
    %c0_i32 = arith.constant 0 : i32
    %c0_i32_0 = arith.constant 0 : i32
    %c0_i32_1 = arith.constant 0 : i32
    return %c0_i32, %c0_i32_0 : i32, i32
  }
  func.func @transform_8(%arg0: i32) -> (i32, i32, i32) {
    %c0_i32 = arith.constant 0 : i32
    %c0_i32_0 = arith.constant 0 : i32
    %c0_i32_1 = arith.constant 0 : i32
    return %arg0, %c0_i32, %c0_i32_0 : i32, i32, i32
  }
}

module attributes {stable_mosaic.version = 11 : i64} {
  func.func @_resblock_kernel(%arg0: i32, %arg1: memref<2x512xf32, #tpu.memory_space<vmem>>, %arg2: memref<1x8x256xf32, #tpu.memory_space<vmem>>, %arg3: memref<8x72xbf16, #tpu.memory_space<vmem>>, %arg4: memref<8x1xf32, #tpu.memory_space<vmem>>, %arg5: memref<8x1xf32, #tpu.memory_space<vmem>>, %arg6: memref<8x72xbf16, #tpu.memory_space<vmem>>, %arg7: memref<8x1xf32, #tpu.memory_space<vmem>>, %arg8: memref<8x1xf32, #tpu.memory_space<vmem>>, %arg9: memref<1x8x256xf32, #tpu.memory_space<vmem>>, %arg10: memref<8x512xf32, #tpu.memory_space<vmem>>) attributes {dimension_semantics = [#tpu.dimension_semantics<parallel>], iteration_bounds = array<i64: 1>, scalar_prefetch = 0 : i64, scratch_operands = 1 : i64, tpu.core_type = #tpu.core_type<tc>, window_params = [{pipeline_mode = #tpu.pipeline_mode<synchronous>, transform_indices = @transform_0, window_bounds = array<i64: 2, 512>}, {transform_indices = @transform_1, window_bounds = array<i64: 1, 8, 256>}, {pipeline_mode = #tpu.pipeline_mode<synchronous>, transform_indices = @transform_2, window_bounds = array<i64: 8, 72>}, {pipeline_mode = #tpu.pipeline_mode<synchronous>, transform_indices = @transform_3, window_bounds = array<i64: 8, 1>}, {pipeline_mode = #tpu.pipeline_mode<synchronous>, transform_indices = @transform_4, window_bounds = array<i64: 8, 1>}, {pipeline_mode = #tpu.pipeline_mode<synchronous>, transform_indices = @transform_5, window_bounds = array<i64: 8, 72>}, {pipeline_mode = #tpu.pipeline_mode<synchronous>, transform_indices = @transform_6, window_bounds = array<i64: 8, 1>}, {pipeline_mode = #tpu.pipeline_mode<synchronous>, transform_indices = @transform_7, window_bounds = array<i64: 8, 1>}, {transform_indices = @transform_8, window_bounds = array<i64: 1, 8, 256>}]} {
    %cst = arith.constant 0.000000e+00 : f32
    %0 = vector.broadcast %cst : f32 to vector<8x128xf32>
    %c0 = arith.constant 0 : index
    %c0_0 = arith.constant 0 : index
    %1 = vector.load %arg10[%c0, %c0_0] : memref<8x512xf32, #tpu.memory_space<vmem>>, vector<8x128xf32>
    tpu.vector_store %arg10[%c0, %c0_0], %0 {strides = array<i32>} : memref<8x512xf32, #tpu.memory_space<vmem>>, vector<8x128xf32>,
    %c0_1 = arith.constant 0 : index
    %c384 = arith.constant 384 : index
    %2 = vector.load %arg10[%c0_1, %c384] : memref<8x512xf32, #tpu.memory_space<vmem>>, vector<8x128xf32>
    tpu.vector_store %arg10[%c0_1, %c384], %0 {strides = array<i32>} : memref<8x512xf32, #tpu.memory_space<vmem>>, vector<8x128xf32>,
    %c0_2 = arith.constant 0 : index
    %c0_3 = arith.constant 0 : index
    %3 = vector.load %arg1[%c0_2, %c0_3] : memref<2x512xf32, #tpu.memory_space<vmem>>, vector<1x512xf32>
    %c1 = arith.constant 1 : index
    %c0_4 = arith.constant 0 : index
    %4 = vector.load %arg1[%c1, %c0_4] : memref<2x512xf32, #tpu.memory_space<vmem>>, vector<1x512xf32>
    %c0_5 = arith.constant 0 : index
    %c0_6 = arith.constant 0 : index
    %c0_7 = arith.constant 0 : index
    %5 = vector.load %arg2[%c0_5, %c0_6, %c0_7] : memref<1x8x256xf32, #tpu.memory_space<vmem>>, vector<1x8x256xf32>
    %6 = vector.shape_cast %5 : vector<1x8x256xf32> to vector<8x256xf32>
    %c0_8 = arith.constant 0 : index
    %c128 = arith.constant 128 : index
    %7 = vector.load %arg10[%c0_8, %c128] : memref<8x512xf32, #tpu.memory_space<vmem>>, vector<8x256xf32>
    tpu.vector_store %arg10[%c0_8, %c128], %6 {strides = array<i32>} : memref<8x512xf32, #tpu.memory_space<vmem>>, vector<8x256xf32>,
    %c0_9 = arith.constant 0 : index
    %c0_10 = arith.constant 0 : index
    %8 = vector.load %arg10[%c0_9, %c0_10] : memref<8x512xf32, #tpu.memory_space<vmem>>, vector<8x512xf32>
    %9 = vector.broadcast %3 : vector<1x512xf32> to vector<8x512xf32>
    %10 = arith.mulf %8, %9 : vector<8x512xf32>
    %11 = vector.broadcast %4 : vector<1x512xf32> to vector<8x512xf32>
    %12 = arith.mulf %8, %11 : vector<8x512xf32>
    %13 = vector.extract_strided_slice %10 {offsets = [0, 111], sizes = [8, 256], strides = [1, 1]} : vector<8x512xf32> to vector<8x256xf32>
    %14 = vector.extract_strided_slice %8 {offsets = [0, 112], sizes = [8, 256], strides = [1, 1]} : vector<8x512xf32> to vector<8x256xf32>
    %15 = vector.extract_strided_slice %12 {offsets = [0, 113], sizes = [8, 256], strides = [1, 1]} : vector<8x512xf32> to vector<8x256xf32>
    %16 = vector.extract_strided_slice %10 {offsets = [0, 127], sizes = [8, 256], strides = [1, 1]} : vector<8x512xf32> to vector<8x256xf32>
    %17 = vector.extract_strided_slice %8 {offsets = [0, 128], sizes = [8, 256], strides = [1, 1]} : vector<8x512xf32> to vector<8x256xf32>
    %18 = vector.extract_strided_slice %12 {offsets = [0, 129], sizes = [8, 256], strides = [1, 1]} : vector<8x512xf32> to vector<8x256xf32>
    %19 = vector.extract_strided_slice %10 {offsets = [0, 143], sizes = [8, 256], strides = [1, 1]} : vector<8x512xf32> to vector<8x256xf32>
    %20 = vector.extract_strided_slice %8 {offsets = [0, 144], sizes = [8, 256], strides = [1, 1]} : vector<8x512xf32> to vector<8x256xf32>
    %21 = vector.extract_strided_slice %12 {offsets = [0, 145], sizes = [8, 256], strides = [1, 1]} : vector<8x512xf32> to vector<8x256xf32>
    %22 = tpu.concatenate %13, %14, %15, %16, %17, %18, %19, %20, %21 in 0 : vector<8x256xf32>, vector<8x256xf32>, vector<8x256xf32>, vector<8x256xf32>, vector<8x256xf32>, vector<8x256xf32>, vector<8x256xf32>, vector<8x256xf32>, vector<8x256xf32> -> vector<72x256xf32>
    %23 = arith.truncf %22 : vector<72x256xf32> to vector<72x256xbf16>
    %c0_11 = arith.constant 0 : index
    %c0_12 = arith.constant 0 : index
    %24 = vector.load %arg3[%c0_11, %c0_12] : memref<8x72xbf16, #tpu.memory_space<vmem>>, vector<8x72xbf16>
    %cst_13 = arith.constant dense<0.000000e+00> : vector<8x256xf32>
    %25 = tpu.matmul %24, %23, %cst_13 {dimension_numbers = #tpu.dot_dimension_numbers<[1], [0], [0], [1], [0, 0, 1, 1], [], []>} : vector<8x72xbf16>, vector<72x256xbf16>, vector<8x256xf32> -> vector<8x256xf32>
    %cst_14 = arith.constant dense<0.000000e+00> : vector<8xf32>
    %26 = vector.multi_reduction <add>, %25, %cst_14 [1] : vector<8x256xf32> to vector<8xf32>
    %27 = vector.shape_cast %26 : vector<8xf32> to vector<8x1xf32>
    %cst_15 = arith.constant 2.560000e+02 : f32
    %28 = vector.broadcast %cst_15 : f32 to vector<8x1xf32>
    %29 = arith.divf %27, %28 : vector<8x1xf32>
    %30 = vector.broadcast %29 : vector<8x1xf32> to vector<8x256xf32>
    %31 = arith.subf %25, %30 : vector<8x256xf32>
    %32 = arith.mulf %31, %31 : vector<8x256xf32>
    %cst_16 = arith.constant dense<0.000000e+00> : vector<8xf32>
    %33 = vector.multi_reduction <add>, %32, %cst_16 [1] : vector<8x256xf32> to vector<8xf32>
    %34 = vector.shape_cast %33 : vector<8xf32> to vector<8x1xf32>
    %cst_17 = arith.constant 2.560000e+02 : f32
    %35 = vector.broadcast %cst_17 : f32 to vector<8x1xf32>
    %36 = arith.divf %34, %35 : vector<8x1xf32>
    %cst_18 = arith.constant 9.99999974E-6 : f32
    %37 = vector.broadcast %cst_18 : f32 to vector<8x1xf32>
    %38 = arith.addf %36, %37 : vector<8x1xf32>
    %39 = math.rsqrt %38 : vector<8x1xf32>
    %c0_19 = arith.constant 0 : index
    %c0_20 = arith.constant 0 : index
    %40 = vector.load %arg4[%c0_19, %c0_20] : memref<8x1xf32, #tpu.memory_space<vmem>>, vector<8x1xf32>
    %41 = arith.mulf %39, %40 : vector<8x1xf32>
    %42 = vector.broadcast %41 : vector<8x1xf32> to vector<8x256xf32>
    %43 = arith.mulf %31, %42 : vector<8x256xf32>
    %c0_21 = arith.constant 0 : index
    %c0_22 = arith.constant 0 : index
    %44 = vector.load %arg5[%c0_21, %c0_22] : memref<8x1xf32, #tpu.memory_space<vmem>>, vector<8x1xf32>
    %45 = vector.broadcast %44 : vector<8x1xf32> to vector<8x256xf32>
    %46 = arith.addf %43, %45 : vector<8x256xf32>
    %cst_23 = arith.constant 0.000000e+00 : f32
    %47 = vector.broadcast %cst_23 : f32 to vector<8x256xf32>
    %48 = arith.cmpf oge, %46, %47 : vector<8x256xf32>
    %cst_24 = arith.constant 0.00999999977 : f32
    %49 = vector.broadcast %cst_24 : f32 to vector<8x256xf32>
    %50 = arith.mulf %49, %46 : vector<8x256xf32>
    %51 = arith.select %48, %46, %50 : vector<8x256xi1>, vector<8x256xf32>
    %c0_25 = arith.constant 0 : index
    %c128_26 = arith.constant 128 : index
    %52 = vector.load %arg10[%c0_25, %c128_26] : memref<8x512xf32, #tpu.memory_space<vmem>>, vector<8x256xf32>
    tpu.vector_store %arg10[%c0_25, %c128_26], %51 {strides = array<i32>} : memref<8x512xf32, #tpu.memory_space<vmem>>, vector<8x256xf32>,
    %c0_27 = arith.constant 0 : index
    %c0_28 = arith.constant 0 : index
    %53 = vector.load %arg10[%c0_27, %c0_28] : memref<8x512xf32, #tpu.memory_space<vmem>>, vector<8x512xf32>
    %54 = vector.broadcast %3 : vector<1x512xf32> to vector<8x512xf32>
    %55 = arith.mulf %53, %54 : vector<8x512xf32>
    %56 = vector.broadcast %4 : vector<1x512xf32> to vector<8x512xf32>
    %57 = arith.mulf %53, %56 : vector<8x512xf32>
    %58 = vector.extract_strided_slice %55 {offsets = [0, 111], sizes = [8, 256], strides = [1, 1]} : vector<8x512xf32> to vector<8x256xf32>
    %59 = vector.extract_strided_slice %53 {offsets = [0, 112], sizes = [8, 256], strides = [1, 1]} : vector<8x512xf32> to vector<8x256xf32>
    %60 = vector.extract_strided_slice %57 {offsets = [0, 113], sizes = [8, 256], strides = [1, 1]} : vector<8x512xf32> to vector<8x256xf32>
    %61 = vector.extract_strided_slice %55 {offsets = [0, 127], sizes = [8, 256], strides = [1, 1]} : vector<8x512xf32> to vector<8x256xf32>
    %62 = vector.extract_strided_slice %53 {offsets = [0, 128], sizes = [8, 256], strides = [1, 1]} : vector<8x512xf32> to vector<8x256xf32>
    %63 = vector.extract_strided_slice %57 {offsets = [0, 129], sizes = [8, 256], strides = [1, 1]} : vector<8x512xf32> to vector<8x256xf32>
    %64 = vector.extract_strided_slice %55 {offsets = [0, 143], sizes = [8, 256], strides = [1, 1]} : vector<8x512xf32> to vector<8x256xf32>
    %65 = vector.extract_strided_slice %53 {offsets = [0, 144], sizes = [8, 256], strides = [1, 1]} : vector<8x512xf32> to vector<8x256xf32>
    %66 = vector.extract_strided_slice %57 {offsets = [0, 145], sizes = [8, 256], strides = [1, 1]} : vector<8x512xf32> to vector<8x256xf32>
    %67 = tpu.concatenate %58, %59, %60, %61, %62, %63, %64, %65, %66 in 0 : vector<8x256xf32>, vector<8x256xf32>, vector<8x256xf32>, vector<8x256xf32>, vector<8x256xf32>, vector<8x256xf32>, vector<8x256xf32>, vector<8x256xf32>, vector<8x256xf32> -> vector<72x256xf32>
    %68 = arith.truncf %67 : vector<72x256xf32> to vector<72x256xbf16>
    %c0_29 = arith.constant 0 : index
    %c0_30 = arith.constant 0 : index
    %69 = vector.load %arg6[%c0_29, %c0_30] : memref<8x72xbf16, #tpu.memory_space<vmem>>, vector<8x72xbf16>
    %cst_31 = arith.constant dense<0.000000e+00> : vector<8x256xf32>
    %70 = tpu.matmul %69, %68, %cst_31 {dimension_numbers = #tpu.dot_dimension_numbers<[1], [0], [0], [1], [0, 0, 1, 1], [], []>} : vector<8x72xbf16>, vector<72x256xbf16>, vector<8x256xf32> -> vector<8x256xf32>
    %cst_32 = arith.constant dense<0.000000e+00> : vector<8xf32>
    %71 = vector.multi_reduction <add>, %70, %cst_32 [1] : vector<8x256xf32> to vector<8xf32>
    %72 = vector.shape_cast %71 : vector<8xf32> to vector<8x1xf32>
    %cst_33 = arith.constant 2.560000e+02 : f32
    %73 = vector.broadcast %cst_33 : f32 to vector<8x1xf32>
    %74 = arith.divf %72, %73 : vector<8x1xf32>
    %75 = vector.broadcast %74 : vector<8x1xf32> to vector<8x256xf32>
    %76 = arith.subf %70, %75 : vector<8x256xf32>
    %77 = arith.mulf %76, %76 : vector<8x256xf32>
    %cst_34 = arith.constant dense<0.000000e+00> : vector<8xf32>
    %78 = vector.multi_reduction <add>, %77, %cst_34 [1] : vector<8x256xf32> to vector<8xf32>
    %79 = vector.shape_cast %78 : vector<8xf32> to vector<8x1xf32>
    %cst_35 = arith.constant 2.560000e+02 : f32
    %80 = vector.broadcast %cst_35 : f32 to vector<8x1xf32>
    %81 = arith.divf %79, %80 : vector<8x1xf32>
    %cst_36 = arith.constant 9.99999974E-6 : f32
    %82 = vector.broadcast %cst_36 : f32 to vector<8x1xf32>
    %83 = arith.addf %81, %82 : vector<8x1xf32>
    %84 = math.rsqrt %83 : vector<8x1xf32>
    %c0_37 = arith.constant 0 : index
    %c0_38 = arith.constant 0 : index
    %85 = vector.load %arg7[%c0_37, %c0_38] : memref<8x1xf32, #tpu.memory_space<vmem>>, vector<8x1xf32>
    %86 = arith.mulf %84, %85 : vector<8x1xf32>
    %87 = vector.broadcast %86 : vector<8x1xf32> to vector<8x256xf32>
    %88 = arith.mulf %76, %87 : vector<8x256xf32>
    %c0_39 = arith.constant 0 : index
    %c0_40 = arith.constant 0 : index
    %89 = vector.load %arg8[%c0_39, %c0_40] : memref<8x1xf32, #tpu.memory_space<vmem>>, vector<8x1xf32>
    %90 = vector.broadcast %89 : vector<8x1xf32> to vector<8x256xf32>
    %91 = arith.addf %88, %90 : vector<8x256xf32>
    %c0_41 = arith.constant 0 : index
    %c0_42 = arith.constant 0 : index
    %c0_43 = arith.constant 0 : index
    %92 = vector.load %arg2[%c0_41, %c0_42, %c0_43] : memref<1x8x256xf32, #tpu.memory_space<vmem>>, vector<1x8x256xf32>
    %93 = vector.shape_cast %92 : vector<1x8x256xf32> to vector<8x256xf32>
    %94 = arith.addf %93, %91 : vector<8x256xf32>
    %c0_44 = arith.constant 0 : index
    %c0_45 = arith.constant 0 : index
    %c0_46 = arith.constant 0 : index
    %95 = vector.load %arg9[%c0_44, %c0_45, %c0_46] : memref<1x8x256xf32, #tpu.memory_space<vmem>>, vector<1x8x256xf32>
    %96 = vector.shape_cast %95 : vector<1x8x256xf32> to vector<8x256xf32>
    %97 = vector.shape_cast %94 : vector<8x256xf32> to vector<1x8x256xf32>
    tpu.vector_store %arg9[%c0_44, %c0_45, %c0_46], %97 {strides = array<i32>} : memref<1x8x256xf32, #tpu.memory_space<vmem>>, vector<1x8x256xf32>,
    return
  }
  func.func @transform_0(%arg0: i32) -> (i32, i32) {
    %c0_i32 = arith.constant 0 : i32
    %c0_i32_0 = arith.constant 0 : i32
    %c0_i32_1 = arith.constant 0 : i32
    return %c0_i32, %c0_i32_0 : i32, i32
  }
  func.func @transform_1(%arg0: i32) -> (i32, i32, i32) {
    %c0_i32 = arith.constant 0 : i32
    %c0_i32_0 = arith.constant 0 : i32
    %c0_i32_1 = arith.constant 0 : i32
    return %arg0, %c0_i32, %c0_i32_0 : i32, i32, i32
  }
  func.func @transform_2(%arg0: i32) -> (i32, i32) {
    %c0_i32 = arith.constant 0 : i32
    %c0_i32_0 = arith.constant 0 : i32
    %c0_i32_1 = arith.constant 0 : i32
    return %c0_i32, %c0_i32_0 : i32, i32
  }
  func.func @transform_3(%arg0: i32) -> (i32, i32) {
    %c0_i32 = arith.constant 0 : i32
    %c0_i32_0 = arith.constant 0 : i32
    %c0_i32_1 = arith.constant 0 : i32
    return %c0_i32, %c0_i32_0 : i32, i32
  }
  func.func @transform_4(%arg0: i32) -> (i32, i32) {
    %c0_i32 = arith.constant 0 : i32
    %c0_i32_0 = arith.constant 0 : i32
    %c0_i32_1 = arith.constant 0 : i32
    return %c0_i32, %c0_i32_0 : i32, i32
  }
  func.func @transform_5(%arg0: i32) -> (i32, i32) {
    %c0_i32 = arith.constant 0 : i32
    %c0_i32_0 = arith.constant 0 : i32
    %c0_i32_1 = arith.constant 0 : i32
    return %c0_i32, %c0_i32_0 : i32, i32
  }
  func.func @transform_6(%arg0: i32) -> (i32, i32) {
    %c0_i32 = arith.constant 0 : i32
    %c0_i32_0 = arith.constant 0 : i32
    %c0_i32_1 = arith.constant 0 : i32
    return %c0_i32, %c0_i32_0 : i32, i32
  }
  func.func @transform_7(%arg0: i32) -> (i32, i32) {
    %c0_i32 = arith.constant 0 : i32
    %c0_i32_0 = arith.constant 0 : i32
    %c0_i32_1 = arith.constant 0 : i32
    return %c0_i32, %c0_i32_0 : i32, i32
  }
  func.func @transform_8(%arg0: i32) -> (i32, i32, i32) {
    %c0_i32 = arith.constant 0 : i32
    %c0_i32_0 = arith.constant 0 : i32
    %c0_i32_1 = arith.constant 0 : i32
    return %arg0, %c0_i32, %c0_i32_0 : i32, i32, i32
  }
}

</mosaic_0001>

<llo_original>
// kernel: tpu_custom_call.1
$region0: #{tpu_custom_call.1}
  #allocation0 [shape = 'u32[]', space=smem, size = 0x4, offset = 0x4, fixed_abs, tag = 'smem constant byte address 0x4 - core index']
  #allocation1 [shape = 'u32[144,128]{1,0:T(1,128)}', space=vmem, size = 0x12000, scoped, tag = 'internal scratch']
  #allocation2 [shape = 'f32[8,512]{1,0:T(8,128)}', space=vmem, size = 0x4000, scoped, tag = 'scratch operand']
  %s0 = inlined_call_operand.vmem [shape: f32[2,512], index: 0, kind: input, shape index: {}]
  %s1 = inlined_call_operand.vmem [shape: f32[1,8,256], index: 1, kind: input, shape index: {}]
  %s2 = inlined_call_operand.vmem [shape: bf16[8,72], index: 2, kind: input, shape index: {}]
  %s3 = inlined_call_operand.vmem [shape: f32[8,1], index: 3, kind: input, shape index: {}]
  %s4 = inlined_call_operand.vmem [shape: f32[8,1], index: 4, kind: input, shape index: {}]
  %s5 = inlined_call_operand.vmem [shape: bf16[8,72], index: 5, kind: input, shape index: {}]
  %s6 = inlined_call_operand.vmem [shape: f32[8,1], index: 6, kind: input, shape index: {}]
  %s7 = inlined_call_operand.vmem [shape: f32[8,1], index: 7, kind: input, shape index: {}]
  %s8 = inlined_call_operand.hbm [shape: f32[1,8,256], index: 8, kind: output, shape index: {}]
  %s9 = sld [smem:[#allocation0]]
  $region42: #{tpu_custom_call.1} parent=0
    _
  %s11 = ssub.s32 1, %s9
  %s12 = scalar_select 0, %s11, %s9
  $region1: #{tpu_custom_call.1} parent=0
    #allocation3 [shape = 'u8[8192]{0}', space=vmem, size = 0x2000, scoped, tag = 'output window, operand 0, single buffered']
    #allocation4 [shape = 's32[1]{0}', space=sflag, size = 0x4, scoped, tag = 'scoped memory for tpu_custom_call.1']
    %13 = vsyncpa [#allocation4], 0
    // Predicated region
    $region2: #{tpu_custom_call.1} parent=1 // pred_check
      _
    $region3: #{tpu_custom_call.1} parent=1 // pred_check_branch
      %15 = sbr.rel (0) target = $region5
    $region4: #{tpu_custom_call.1} parent=1 // pred_region
      _
    $region5: #{tpu_custom_call.1} parent=1 // pred_fallthru
      _
    // Predicated region
    $region6: #{tpu_custom_call.1} parent=1 // pred_check
      _
    $region7: #{tpu_custom_call.1} parent=1 // pred_check_branch
      %17 = sbr.rel (0) target = $region9
    $region8: #{tpu_custom_call.1} parent=1 // pred_region
      _
    $region9: #{tpu_custom_call.1} parent=1 // pred_fallthru
      _
    // Predicated region
    $region10: #{tpu_custom_call.1} parent=1 // pred_check
      _
    $region11: #{tpu_custom_call.1} parent=1 // pred_check_branch
      %19 = sbr.rel (0) target = $region13
    $region12: #{tpu_custom_call.1} parent=1 // pred_region
      _
    $region13: #{tpu_custom_call.1} parent=1 // pred_fallthru
      _
    // Predicated region
    $region14: #{tpu_custom_call.1} parent=1 // pred_check
      _
    $region15: #{tpu_custom_call.1} parent=1 // pred_check_branch
      %21 = sbr.rel (0) target = $region17
    $region16: #{tpu_custom_call.1} parent=1 // pred_region
      _
    $region17: #{tpu_custom_call.1} parent=1 // pred_fallthru
      _
    // Predicated region
    $region18: #{tpu_custom_call.1} parent=1 // pred_check
      _
    $region19: #{tpu_custom_call.1} parent=1 // pred_check_branch
      %23 = sbr.rel (0) target = $region21
    $region20: #{tpu_custom_call.1} parent=1 // pred_region
      _
    $region21: #{tpu_custom_call.1} parent=1 // pred_fallthru
      _
    // Predicated region
    $region22: #{tpu_custom_call.1} parent=1 // pred_check
      _
    $region23: #{tpu_custom_call.1} parent=1 // pred_check_branch
      %25 = sbr.rel (0) target = $region25
    $region24: #{tpu_custom_call.1} parent=1 // pred_region
      _
    $region25: #{tpu_custom_call.1} parent=1 // pred_fallthru
      _
    // Predicated region
    $region26: #{tpu_custom_call.1} parent=1 // pred_check
      _
    $region27: #{tpu_custom_call.1} parent=1 // pred_check_branch
      %27 = sbr.rel (0) target = $region29
    $region28: #{tpu_custom_call.1} parent=1 // pred_region
      _
    $region29: #{tpu_custom_call.1} parent=1 // pred_fallthru
      _
    // Predicated region
    $region30: #{tpu_custom_call.1} parent=1 // pred_check
      _
    $region31: #{tpu_custom_call.1} parent=1 // pred_check_branch
      %29 = sbr.rel (0) target = $region33
    $region32: #{tpu_custom_call.1} parent=1 // pred_region
      _
    $region33: #{tpu_custom_call.1} parent=1 // pred_fallthru
      _
    %31 = vst [vmem:[#allocation2] sm:$0xff] 0.0
    %32 = vst [vmem:[#allocation2 + $0x18] sm:$0xff] 0.0
    %v33 = vld [vmem:[%s0] ss:$2 sm:$0xf]
    %s34 = scalar_lea.vmem %s0, 1
    %v35 = vld [vmem:[%s34] ss:$2 sm:$0xf]
    %v36 = vld [vmem:[%s1] sm:$0xff]
    %v37 = vld [vmem:[%s1 + $0x8] sm:$0xff]
    %38 = vst [vmem:[#allocation2 + $0x8] sm:$0xff] %v36
    %39 = vst [vmem:[#allocation2 + $0x10] sm:$0xff] %v37
    %v40 = vld [vmem:[#allocation2] sm:$0xff]
    %v41 = vld [vmem:[#allocation2 + $0x8] sm:$0xff]
    %v42 = vld [vmem:[#allocation2 + $0x10] sm:$0xff]
    %v43 = vld [vmem:[#allocation2 + $0x18] sm:$0xff]
    %v45 = vlaneseq
    %v46 = vshrl.u32 %v45, 7
    %v47 = vsub.s32 0, %v46
    %v48 = vrot.slane %v33, %v47
    %v49 = vlaneseq
    %v50 = vshrl.u32 %v49, 7
    %v51 = vsub.s32 1, %v50
    %v52 = vrot.slane %v33, %v51
    %v53 = vlaneseq
    %v54 = vshrl.u32 %v53, 7
    %v55 = vsub.s32 2, %v54
    %v56 = vrot.slane %v33, %v55
    %v57 = vlaneseq
    %v58 = vshrl.u32 %v57, 7
    %v59 = vsub.s32 3, %v58
    %v60 = vrot.slane %v33, %v59
    %v65 = vmul.f32 %v40, %v48
    %v66 = vmul.f32 %v41, %v52
    %v67 = vmul.f32 %v42, %v56
    %v68 = vmul.f32 %v43, %v60
    %v70 = vlaneseq
    %v71 = vshrl.u32 %v70, 7
    %v72 = vsub.s32 0, %v71
    %v73 = vrot.slane %v35, %v72
    %v74 = vlaneseq
    %v75 = vshrl.u32 %v74, 7
    %v76 = vsub.s32 1, %v75
    %v77 = vrot.slane %v35, %v76
    %v78 = vlaneseq
    %v79 = vshrl.u32 %v78, 7
    %v80 = vsub.s32 2, %v79
    %v81 = vrot.slane %v35, %v80
    %v82 = vlaneseq
    %v83 = vshrl.u32 %v82, 7
    %v84 = vsub.s32 3, %v83
    %v85 = vrot.slane %v35, %v84
    %v90 = vmul.f32 %v40, %v73
    %v91 = vmul.f32 %v41, %v77
    %v92 = vmul.f32 %v42, %v81
    %v93 = vmul.f32 %v43, %v85
    %97 = vrot.lane.b32.xlu0 %v40, 127
    %v98 = vpop.permute.xlu0 %97
    %99 = vrot.lane.b32.xlu0 %v41, 127
    %v100 = vpop.permute.xlu0 %99
    %101 = vrot.lane.b32.xlu0 %v42, 127
    %v102 = vpop.permute.xlu0 %101
    %vm103 = vcmask 1039360
    %v104 = vsel %vm103, %v98, %v100
    %v105 = vsel %vm103, %v100, %v102
    %112 = vrot.lane.b32.xlu0 %v90, 126
    %v113 = vpop.permute.xlu0 %112
    %114 = vrot.lane.b32.xlu0 %v91, 126
    %v115 = vpop.permute.xlu0 %114
    %116 = vrot.lane.b32.xlu0 %v92, 126
    %v117 = vpop.permute.xlu0 %116
    %vm118 = vcmask 1031168
    %v119 = vsel %vm118, %v113, %v115
    %v120 = vsel %vm118, %v115, %v117
    %127 = vrot.lane.b32.xlu0 %v65, 112
    %v128 = vpop.permute.xlu0 %127
    %129 = vrot.lane.b32.xlu0 %v66, 112
    %v130 = vpop.permute.xlu0 %129
    %131 = vrot.lane.b32.xlu0 %v67, 112
    %v132 = vpop.permute.xlu0 %131
    %vm133 = vcmask 916480
    %v134 = vsel %vm133, %v128, %v130
    %v135 = vsel %vm133, %v130, %v132
    %139 = vrot.lane.b32.xlu0 %v41, 111
    %v140 = vpop.permute.xlu0 %139
    %141 = vrot.lane.b32.xlu0 %v42, 111
    %v142 = vpop.permute.xlu0 %141
    %vm143 = vcmask 908288
    %v144 = vsel %vm143, %v140, %v142
    %149 = vrot.lane.b32.xlu0 %v91, 110
    %v150 = vpop.permute.xlu0 %149
    %151 = vrot.lane.b32.xlu0 %v92, 110
    %v152 = vpop.permute.xlu0 %151
    %153 = vrot.lane.b32.xlu0 %v93, 110
    %v154 = vpop.permute.xlu0 %153
    %vm155 = vcmask 900096
    %v156 = vsel %vm155, %v150, %v152
    %v157 = vsel %vm155, %v152, %v154
    %162 = vrot.lane.b32.xlu0 %v66, 96
    %v163 = vpop.permute.xlu0 %162
    %164 = vrot.lane.b32.xlu0 %v67, 96
    %v165 = vpop.permute.xlu0 %164
    %166 = vrot.lane.b32.xlu0 %v68, 96
    %v167 = vpop.permute.xlu0 %166
    %vm168 = vcmask 785408
    %v169 = vsel %vm168, %v163, %v165
    %v170 = vsel %vm168, %v165, %v167
    %175 = vrot.lane.b32.xlu0 %v41, 95
    %v176 = vpop.permute.xlu0 %175
    %177 = vrot.lane.b32.xlu0 %v42, 95
    %v178 = vpop.permute.xlu0 %177
    %179 = vrot.lane.b32.xlu0 %v43, 95
    %v180 = vpop.permute.xlu0 %179
    %vm181 = vcmask 777216
    %v182 = vsel %vm181, %v176, %v178
    %v183 = vsel %vm181, %v178, %v180
    %187 = vrot.lane.b32.xlu0 %v91, 94
    %v188 = vpop.permute.xlu0 %187
    %189 = vrot.lane.b32.xlu0 %v92, 94
    %v190 = vpop.permute.xlu0 %189
    %191 = vrot.lane.b32.xlu0 %v93, 94
    %v192 = vpop.permute.xlu0 %191
    %vm193 = vcmask 769024
    %v194 = vsel %vm193, %v188, %v190
    %v195 = vsel %vm193, %v190, %v192
    %v199 = vpack.c.bf16 %v104, %v65
    %v200 = vpack.c.bf16 %v105, %v66
    %v201 = vpack.c.bf16 %v102, %v67
    %v202 = vpack.c.bf16 %v134, %v119
    %v203 = vpack.c.bf16 %v135, %v120
    %v204 = vpack.c.bf16 %v132, %v117
    %v205 = vpack.c.bf16 %v150, %v140
    %v206 = vpack.c.bf16 %v156, %v144
    %v207 = vpack.c.bf16 %v157, %v142
    %v208 = vpack.c.bf16 %v176, %v163
    %v209 = vpack.c.bf16 %v182, %v169
    %v210 = vpack.c.bf16 %v183, %v170
    %v211 = vpack.c.bf16 %v188, %v188
    %v212 = vpack.c.bf16 %v194, %v194
    %v213 = vpack.c.bf16 %v195, %v195
    %v214 = vld [vmem:[%s2] sm:$0xf]
    %230 = vrot.lane.b32.xlu0 %v199, 17
    %v231 = vpop.permute.xlu0 %230
    %232 = vrot.lane.b32.xlu0 %v200, 17
    %v233 = vpop.permute.xlu0 %232
    %234 = vrot.lane.b32.xlu0 %v201, 17
    %v235 = vpop.permute.xlu0 %234
    %236 = vrot.lane.b32.xlu0 %v202, 17
    %v237 = vpop.permute.xlu0 %236
    %238 = vrot.lane.b32.xlu0 %v203, 17
    %v239 = vpop.permute.xlu0 %238
    %240 = vrot.lane.b32.xlu0 %v204, 17
    %v241 = vpop.permute.xlu0 %240
    %242 = vrot.lane.b32.xlu0 %v205, 17
    %v243 = vpop.permute.xlu0 %242
    %244 = vrot.lane.b32.xlu0 %v206, 17
    %v245 = vpop.permute.xlu0 %244
    %246 = vrot.lane.b32.xlu0 %v207, 17
    %v247 = vpop.permute.xlu0 %246
    %248 = vrot.lane.b32.xlu0 %v208, 17
    %v249 = vpop.permute.xlu0 %248
    %250 = vrot.lane.b32.xlu0 %v209, 17
    %v251 = vpop.permute.xlu0 %250
    %252 = vrot.lane.b32.xlu0 %v210, 17
    %v253 = vpop.permute.xlu0 %252
    %254 = vrot.lane.b32.xlu0 %v211, 17
    %v255 = vpop.permute.xlu0 %254
    %256 = vrot.lane.b32.xlu0 %v212, 17
    %v257 = vpop.permute.xlu0 %256
    %258 = vrot.lane.b32.xlu0 %v213, 17
    %v259 = vpop.permute.xlu0 %258
    %vm260 = vcmask 138240
    %v261 = vsel %vm260, %v231, %v233
    %v262 = vsel %vm260, %v233, %v235
    %v263 = vsel %vm260, %v237, %v239
    %v264 = vsel %vm260, %v239, %v241
    %v265 = vsel %vm260, %v243, %v245
    %v266 = vsel %vm260, %v245, %v247
    %v267 = vsel %vm260, %v249, %v251
    %v268 = vsel %vm260, %v251, %v253
    %v269 = vsel %vm260, %v255, %v257
    %v270 = vsel %vm260, %v257, %v259
    %vm279 = vcmask 588800
    %v281 = vsel %vm279, %v214, 0
    %vm283 = vcmask 1043456
    %v285 = vsel %vm283, %v269, 0
    %v288 = vsel %vm283, %v270, 0
    %290 = vmatprep.subr.bf16.mxu0 %v262
    %291 = vmatpush1.bf16.msra.mxu0 %v261
    %292 = vmatprep.subr.bf16.mxu0 %v264
    %293 = vmatpush1.bf16.msra.mxu0 %v263
    %294 = vmatprep.subr.bf16.mxu0 %v266
    %295 = vmatpush1.bf16.msra.mxu0 %v265
    %296 = vmatprep.subr.bf16.mxu0 %v268
    %297 = vmatpush1.bf16.msra.mxu0 %v267
    %298 = vmatprep.subr.bf16.mxu0 %v288
    %299 = vmatpush1.bf16.msra.mxu0 %v285
    %300 = vmatprep.subr.bf16.mxu0 0
    %301 = vmatpush1.bf16.msra.mxu0 0
    %302 = vmatprep.subr.bf16.mxu0 0
    %303 = vmatpush1.bf16.msra.mxu0 0
    %304 = vmatprep.subr.bf16.mxu0 0
    %305 = vmatpush1.bf16.msra.mxu0 0
    %306 = vmatprep.subr.bf16.mxu0 0
    %307 = vmatpush1.bf16.msra.mxu0 0
    %308 = vmatprep.subr.bf16.mxu0 0
    %309 = vmatpush1.bf16.msra.mxu0 0
    %310 = vmatprep.subr.bf16.mxu0 0
    %311 = vmatpush1.bf16.msra.mxu0 0
    %312 = vmatprep.subr.bf16.mxu0 0
    %313 = vmatpush1.bf16.msra.mxu0 0
    %314 = vmatprep.subr.bf16.mxu0 0
    %315 = vmatpush1.bf16.msra.mxu0 0
    %316 = vmatprep.subr.bf16.mxu0 0
    %317 = vmatpush1.bf16.msra.mxu0 0
    %318 = vmatprep.subr.bf16.mxu0 0
    %319 = vmatpush1.bf16.msra.mxu0 0
    %320 = vmatprep.subr.bf16.mxu0 0
    %321 = vmatpush1.bf16.msra.mxu0 0
    %322 = vmatprep.mubr.bf16.mxu0 0
    %323 = vmatmul.mubr.bf16.gmra.mrb[0].mxu0 %v281
    %v324 = vpop.f32.mrb[0].mxu0
    %v325 = vadd.f32 0.0, %v324
    %v326 = vpop.f32.mrb[0].mxu0
    %v327 = vadd.f32 0.0, %v326
    %v328 = vpop.f32.mrb[0].mxu0
    %v329 = vpop.f32.mrb[0].mxu0
    %330 = vdwg.mxu0
    %v331 = vadd.f32 %v325, %v327
    %332 = vadd.xlane.f32.xlu0 %v331
    %v333 = vpop.xlane.xlu0 %332
    %v334 = vrcp.pop 256.0
    %v335 = vmul.f32 %v333, %v334
    %v336 = vsub.f32 %v325, %v335
    %v337 = vsub.f32 %v327, %v335
    %v338 = vmul.f32 %v336, %v336
    %v339 = vmul.f32 %v337, %v337
    %v340 = vadd.f32 %v338, %v339
    %341 = vadd.xlane.f32.xlu0 %v340
    %v342 = vpop.xlane.xlu0 %341
    %v343 = vmul.f32 %v342, %v334
    %v344 = vadd.f32 %v343, 1e-05
    %v345 = vrsqrt.pop %v344
    %v346 = vld [vmem:[%s3] sm:$0xff]
    %v347 = vmul.f32 %v345, %v346
    %349 = vset.pattern.permute.xlu0 0
    %350 = vperm.xlu0 %349, %v347
    %v351 = vpop.permute.xlu0 %350
    %v353 = vmul.f32 %v336, %v351
    %v354 = vmul.f32 %v337, %v351
    %v355 = vld [vmem:[%s4] sm:$0xff]
    %357 = vset.pattern.permute.xlu0 0
    %358 = vperm.xlu0 %357, %v355
    %v359 = vpop.permute.xlu0 %358
    %v361 = vadd.f32 %v353, %v359
    %v362 = vadd.f32 %v354, %v359
    %vm363 = vcmp.ge.f32.partialorder %v361, 0.0
    %vm364 = vcmp.ge.f32.partialorder %v362, 0.0
    %v365 = vmul.f32 %v361, 0.01
    %v366 = vmul.f32 %v362, 0.01
    %v367 = vsel %vm363, %v361, %v365
    %v368 = vsel %vm364, %v362, %v366
    %369 = vst [vmem:[#allocation2 + $0x8] sm:$0xff] %v367
    %370 = vst [vmem:[#allocation2 + $0x10] sm:$0xff] %v368
    %v371 = vld [vmem:[#allocation2] sm:$0xff]
    %v372 = vld [vmem:[#allocation2 + $0x8] sm:$0xff]
    %v373 = vld [vmem:[#allocation2 + $0x10] sm:$0xff]
    %v374 = vld [vmem:[#allocation2 + $0x18] sm:$0xff]
    %v375 = vmul.f32 %v371, %v48
    %v376 = vmul.f32 %v372, %v52
    %v377 = vmul.f32 %v373, %v56
    %v378 = vmul.f32 %v374, %v60
    %v379 = vmul.f32 %v371, %v73
    %v380 = vmul.f32 %v372, %v77
    %v381 = vmul.f32 %v373, %v81
    %v382 = vmul.f32 %v374, %v85
    %386 = vrot.lane.b32.xlu0 %v371, 127
    %v387 = vpop.permute.xlu0 %386
    %388 = vrot.lane.b32.xlu0 %v372, 127
    %v389 = vpop.permute.xlu0 %388
    %390 = vrot.lane.b32.xlu0 %v373, 127
    %v391 = vpop.permute.xlu0 %390
    %v392 = vsel %vm103, %v387, %v389
    %v393 = vsel %vm103, %v389, %v391
    %400 = vrot.lane.b32.xlu0 %v379, 126
    %v401 = vpop.permute.xlu0 %400
    %402 = vrot.lane.b32.xlu0 %v380, 126
    %v403 = vpop.permute.xlu0 %402
    %404 = vrot.lane.b32.xlu0 %v381, 126
    %v405 = vpop.permute.xlu0 %404
    %v406 = vsel %vm118, %v401, %v403
    %v407 = vsel %vm118, %v403, %v405
    %414 = vrot.lane.b32.xlu0 %v375, 112
    %v415 = vpop.permute.xlu0 %414
    %416 = vrot.lane.b32.xlu0 %v376, 112
    %v417 = vpop.permute.xlu0 %416
    %418 = vrot.lane.b32.xlu0 %v377, 112
    %v419 = vpop.permute.xlu0 %418
    %v420 = vsel %vm133, %v415, %v417
    %v421 = vsel %vm133, %v417, %v419
    %425 = vrot.lane.b32.xlu0 %v372, 111
    %v426 = vpop.permute.xlu0 %425
    %427 = vrot.lane.b32.xlu0 %v373, 111
    %v428 = vpop.permute.xlu0 %427
    %v429 = vsel %vm143, %v426, %v428
    %434 = vrot.lane.b32.xlu0 %v380, 110
    %v435 = vpop.permute.xlu0 %434
    %436 = vrot.lane.b32.xlu0 %v381, 110
    %v437 = vpop.permute.xlu0 %436
    %438 = vrot.lane.b32.xlu0 %v382, 110
    %v439 = vpop.permute.xlu0 %438
    %v440 = vsel %vm155, %v435, %v437
    %v441 = vsel %vm155, %v437, %v439
    %446 = vrot.lane.b32.xlu0 %v376, 96
    %v447 = vpop.permute.xlu0 %446
    %448 = vrot.lane.b32.xlu0 %v377, 96
    %v449 = vpop.permute.xlu0 %448
    %450 = vrot.lane.b32.xlu0 %v378, 96
    %v451 = vpop.permute.xlu0 %450
    %v452 = vsel %vm168, %v447, %v449
    %v453 = vsel %vm168, %v449, %v451
    %458 = vrot.lane.b32.xlu0 %v372, 95
    %v459 = vpop.permute.xlu0 %458
    %460 = vrot.lane.b32.xlu0 %v373, 95
    %v461 = vpop.permute.xlu0 %460
    %462 = vrot.lane.b32.xlu0 %v374, 95
    %v463 = vpop.permute.xlu0 %462
    %v464 = vsel %vm181, %v459, %v461
    %v465 = vsel %vm181, %v461, %v463
    %469 = vrot.lane.b32.xlu0 %v380, 94
    %v470 = vpop.permute.xlu0 %469
    %471 = vrot.lane.b32.xlu0 %v381, 94
    %v472 = vpop.permute.xlu0 %471
    %473 = vrot.lane.b32.xlu0 %v382, 94
    %v474 = vpop.permute.xlu0 %473
    %v475 = vsel %vm193, %v470, %v472
    %v476 = vsel %vm193, %v472, %v474
    %v480 = vpack.c.bf16 %v392, %v375
    %v481 = vpack.c.bf16 %v393, %v376
    %v482 = vpack.c.bf16 %v391, %v377
    %v483 = vpack.c.bf16 %v420, %v406
    %v484 = vpack.c.bf16 %v421, %v407
    %v485 = vpack.c.bf16 %v419, %v405
    %v486 = vpack.c.bf16 %v435, %v426
    %v487 = vpack.c.bf16 %v440, %v429
    %v488 = vpack.c.bf16 %v441, %v428
    %v489 = vpack.c.bf16 %v459, %v447
    %v490 = vpack.c.bf16 %v464, %v452
    %v491 = vpack.c.bf16 %v465, %v453
    %v492 = vpack.c.bf16 %v470, %v470
    %v493 = vpack.c.bf16 %v475, %v475
    %v494 = vpack.c.bf16 %v476, %v476
    %v495 = vld [vmem:[%s5] sm:$0xf]
    %511 = vrot.lane.b32.xlu0 %v480, 17
    %v512 = vpop.permute.xlu0 %511
    %513 = vrot.lane.b32.xlu0 %v481, 17
    %v514 = vpop.permute.xlu0 %513
    %515 = vrot.lane.b32.xlu0 %v482, 17
    %v516 = vpop.permute.xlu0 %515
    %517 = vrot.lane.b32.xlu0 %v483, 17
    %v518 = vpop.permute.xlu0 %517
    %519 = vrot.lane.b32.xlu0 %v484, 17
    %v520 = vpop.permute.xlu0 %519
    %521 = vrot.lane.b32.xlu0 %v485, 17
    %v522 = vpop.permute.xlu0 %521
    %523 = vrot.lane.b32.xlu0 %v486, 17
    %v524 = vpop.permute.xlu0 %523
    %525 = vrot.lane.b32.xlu0 %v487, 17
    %v526 = vpop.permute.xlu0 %525
    %527 = vrot.lane.b32.xlu0 %v488, 17
    %v528 = vpop.permute.xlu0 %527
    %529 = vrot.lane.b32.xlu0 %v489, 17
    %v530 = vpop.permute.xlu0 %529
    %531 = vrot.lane.b32.xlu0 %v490, 17
    %v532 = vpop.permute.xlu0 %531
    %533 = vrot.lane.b32.xlu0 %v491, 17
    %v534 = vpop.permute.xlu0 %533
    %535 = vrot.lane.b32.xlu0 %v492, 17
    %v536 = vpop.permute.xlu0 %535
    %537 = vrot.lane.b32.xlu0 %v493, 17
    %v538 = vpop.permute.xlu0 %537
    %539 = vrot.lane.b32.xlu0 %v494, 17
    %v540 = vpop.permute.xlu0 %539
    %v541 = vsel %vm260, %v512, %v514
    %v542 = vsel %vm260, %v514, %v516
    %v543 = vsel %vm260, %v518, %v520
    %v544 = vsel %vm260, %v520, %v522
    %v545 = vsel %vm260, %v524, %v526
    %v546 = vsel %vm260, %v526, %v528
    %v547 = vsel %vm260, %v530, %v532
    %v548 = vsel %vm260, %v532, %v534
    %v549 = vsel %vm260, %v536, %v538
    %v550 = vsel %vm260, %v538, %v540
    %v560 = vsel %vm279, %v495, 0
    %v563 = vsel %vm283, %v549, 0
    %v566 = vsel %vm283, %v550, 0
    %568 = vmatprep.subr.bf16.mxu0 %v542
    %569 = vmatpush1.bf16.msra.mxu0 %v541
    %570 = vmatprep.subr.bf16.mxu0 %v544
    %571 = vmatpush1.bf16.msra.mxu0 %v543
    %572 = vmatprep.subr.bf16.mxu0 %v546
    %573 = vmatpush1.bf16.msra.mxu0 %v545
    %574 = vmatprep.subr.bf16.mxu0 %v548
    %575 = vmatpush1.bf16.msra.mxu0 %v547
    %576 = vmatprep.subr.bf16.mxu0 %v566
    %577 = vmatpush1.bf16.msra.mxu0 %v563
    %578 = vmatprep.subr.bf16.mxu0 0
    %579 = vmatpush1.bf16.msra.mxu0 0
    %580 = vmatprep.subr.bf16.mxu0 0
    %581 = vmatpush1.bf16.msra.mxu0 0
    %582 = vmatprep.subr.bf16.mxu0 0
    %583 = vmatpush1.bf16.msra.mxu0 0
    %584 = vmatprep.subr.bf16.mxu0 0
    %585 = vmatpush1.bf16.msra.mxu0 0
    %586 = vmatprep.subr.bf16.mxu0 0
    %587 = vmatpush1.bf16.msra.mxu0 0
    %588 = vmatprep.subr.bf16.mxu0 0
    %589 = vmatpush1.bf16.msra.mxu0 0
    %590 = vmatprep.subr.bf16.mxu0 0
    %591 = vmatpush1.bf16.msra.mxu0 0
    %592 = vmatprep.subr.bf16.mxu0 0
    %593 = vmatpush1.bf16.msra.mxu0 0
    %594 = vmatprep.subr.bf16.mxu0 0
    %595 = vmatpush1.bf16.msra.mxu0 0
    %596 = vmatprep.subr.bf16.mxu0 0
    %597 = vmatpush1.bf16.msra.mxu0 0
    %598 = vmatprep.subr.bf16.mxu0 0
    %599 = vmatpush1.bf16.msra.mxu0 0
    %600 = vmatprep.mubr.bf16.mxu0 0
    %601 = vmatmul.mubr.bf16.gmra.mrb[0].mxu0 %v560
    %v602 = vpop.f32.mrb[0].mxu0
    %v603 = vadd.f32 0.0, %v602
    %v604 = vpop.f32.mrb[0].mxu0
    %v605 = vadd.f32 0.0, %v604
    %v606 = vpop.f32.mrb[0].mxu0
    %v607 = vpop.f32.mrb[0].mxu0
    %608 = vdwg.mxu0
    %v609 = vadd.f32 %v603, %v605
    %610 = vadd.xlane.f32.xlu0 %v609
    %v611 = vpop.xlane.xlu0 %610
    %v612 = vmul.f32 %v611, %v334
    %v613 = vsub.f32 %v603, %v612
    %v614 = vsub.f32 %v605, %v612
    %v615 = vmul.f32 %v613, %v613
    %v616 = vmul.f32 %v614, %v614
    %v617 = vadd.f32 %v615, %v616
    %618 = vadd.xlane.f32.xlu0 %v617
    %v619 = vpop.xlane.xlu0 %618
    %v620 = vmul.f32 %v619, %v334
    %v621 = vadd.f32 %v620, 1e-05
    %v622 = vrsqrt.pop %v621
    %v623 = vld [vmem:[%s6] sm:$0xff]
    %v624 = vmul.f32 %v622, %v623
    %626 = vset.pattern.permute.xlu0 0
    %627 = vperm.xlu0 %626, %v624
    %v628 = vpop.permute.xlu0 %627
    %v630 = vmul.f32 %v613, %v628
    %v631 = vmul.f32 %v614, %v628
    %v632 = vld [vmem:[%s7] sm:$0xff]
    %634 = vset.pattern.permute.xlu0 0
    %635 = vperm.xlu0 %634, %v632
    %v636 = vpop.permute.xlu0 %635
    %v638 = vadd.f32 %v630, %v636
    %v639 = vadd.f32 %v631, %v636
    %v640 = vld [vmem:[%s1] sm:$0xff]
    %v641 = vld [vmem:[%s1 + $0x8] sm:$0xff]
    %v642 = vadd.f32 %v640, %v638
    %v643 = vadd.f32 %v641, %v639
    %644 = vst [vmem:[#allocation3] sm:$0xff] %v642
    %645 = vst [vmem:[#allocation3 + $0x8] sm:$0xff] %v643
    // Predicated region
    $region34: #{tpu_custom_call.1} parent=1 // pred_check
      _
    $region35: #{tpu_custom_call.1} parent=1 // pred_check_branch
      %647 = sbr.rel (0) target = $region37
    $region36: #{tpu_custom_call.1} parent=1 // pred_region
      %s649 = ssub.s32 256, 256
      %650 = vsyncadd [#allocation4], %s649
      %s652 = sshll.u32 [#allocation3], 4
      %s653 = int_to_ptr.vmem [resolvable:$true] %s652
      %655 = dma.vmem_to_hbm [thread:$0]  %s653, 256, %s8, [#allocation4]
    $region37: #{tpu_custom_call.1} parent=1 // pred_fallthru
      _
    // Predicated region
    $region38: #{tpu_custom_call.1} parent=1 // pred_check
      _
    $region39: #{tpu_custom_call.1} parent=1 // pred_check_branch
      %657 = sbr.rel (0) target = $region41
    $region40: #{tpu_custom_call.1} parent=1 // pred_region
      %658 = dma.done [#allocation4], 256
    $region41: #{tpu_custom_call.1} parent=1 // pred_fallthru
      _
    %659 = vsyncpa [#allocation4], 1

// kernel: tpu_custom_call.1
$region0: #{tpu_custom_call.1}
  #allocation0 [shape = 'u32[]', space=smem, size = 0x4, offset = 0x4, fixed_abs, tag = 'smem constant byte address 0x4 - core index']
  #allocation1 [shape = 'u32[144,128]{1,0:T(1,128)}', space=vmem, size = 0x12000, scoped, tag = 'internal scratch']
  #allocation2 [shape = 'f32[8,512]{1,0:T(8,128)}', space=vmem, size = 0x4000, scoped, tag = 'scratch operand']
  %s0 = inlined_call_operand.vmem [shape: f32[2,512], index: 0, kind: input, shape index: {}]
  %s1 = inlined_call_operand.vmem [shape: f32[1,8,256], index: 1, kind: input, shape index: {}]
  %s2 = inlined_call_operand.vmem [shape: bf16[8,72], index: 2, kind: input, shape index: {}]
  %s3 = inlined_call_operand.vmem [shape: f32[8,1], index: 3, kind: input, shape index: {}]
  %s4 = inlined_call_operand.vmem [shape: f32[8,1], index: 4, kind: input, shape index: {}]
  %s5 = inlined_call_operand.vmem [shape: bf16[8,72], index: 5, kind: input, shape index: {}]
  %s6 = inlined_call_operand.vmem [shape: f32[8,1], index: 6, kind: input, shape index: {}]
  %s7 = inlined_call_operand.vmem [shape: f32[8,1], index: 7, kind: input, shape index: {}]
  %s8 = inlined_call_operand.hbm [shape: f32[1,8,256], index: 8, kind: output, shape index: {}]
  %s9 = sld [smem:[#allocation0]]
  $region42: #{tpu_custom_call.1} parent=0
    _
  %s11 = ssub.s32 1, %s9
  %s12 = scalar_select 0, %s11, %s9
  $region1: #{tpu_custom_call.1} parent=0
    #allocation3 [shape = 'u8[8192]{0}', space=vmem, size = 0x2000, scoped, tag = 'output window, operand 0, single buffered']
    #allocation4 [shape = 's32[1]{0}', space=sflag, size = 0x4, scoped, tag = 'scoped memory for tpu_custom_call.1']
    %13 = vsyncpa [#allocation4], 0
    // Predicated region
    $region2: #{tpu_custom_call.1} parent=1 // pred_check
      _
    $region3: #{tpu_custom_call.1} parent=1 // pred_check_branch
      %15 = sbr.rel (0) target = $region5
    $region4: #{tpu_custom_call.1} parent=1 // pred_region
      _
    $region5: #{tpu_custom_call.1} parent=1 // pred_fallthru
      _
    // Predicated region
    $region6: #{tpu_custom_call.1} parent=1 // pred_check
      _
    $region7: #{tpu_custom_call.1} parent=1 // pred_check_branch
      %17 = sbr.rel (0) target = $region9
    $region8: #{tpu_custom_call.1} parent=1 // pred_region
      _
    $region9: #{tpu_custom_call.1} parent=1 // pred_fallthru
      _
    // Predicated region
    $region10: #{tpu_custom_call.1} parent=1 // pred_check
      _
    $region11: #{tpu_custom_call.1} parent=1 // pred_check_branch
      %19 = sbr.rel (0) target = $region13
    $region12: #{tpu_custom_call.1} parent=1 // pred_region
      _
    $region13: #{tpu_custom_call.1} parent=1 // pred_fallthru
      _
    // Predicated region
    $region14: #{tpu_custom_call.1} parent=1 // pred_check
      _
    $region15: #{tpu_custom_call.1} parent=1 // pred_check_branch
      %21 = sbr.rel (0) target = $region17
    $region16: #{tpu_custom_call.1} parent=1 // pred_region
      _
    $region17: #{tpu_custom_call.1} parent=1 // pred_fallthru
      _
    // Predicated region
    $region18: #{tpu_custom_call.1} parent=1 // pred_check
      _
    $region19: #{tpu_custom_call.1} parent=1 // pred_check_branch
      %23 = sbr.rel (0) target = $region21
    $region20: #{tpu_custom_call.1} parent=1 // pred_region
      _
    $region21: #{tpu_custom_call.1} parent=1 // pred_fallthru
      _
    // Predicated region
    $region22: #{tpu_custom_call.1} parent=1 // pred_check
      _
    $region23: #{tpu_custom_call.1} parent=1 // pred_check_branch
      %25 = sbr.rel (0) target = $region25
    $region24: #{tpu_custom_call.1} parent=1 // pred_region
      _
    $region25: #{tpu_custom_call.1} parent=1 // pred_fallthru
      _
    // Predicated region
    $region26: #{tpu_custom_call.1} parent=1 // pred_check
      _
    $region27: #{tpu_custom_call.1} parent=1 // pred_check_branch
      %27 = sbr.rel (0) target = $region29
    $region28: #{tpu_custom_call.1} parent=1 // pred_region
      _
    $region29: #{tpu_custom_call.1} parent=1 // pred_fallthru
      _
    // Predicated region
    $region30: #{tpu_custom_call.1} parent=1 // pred_check
      _
    $region31: #{tpu_custom_call.1} parent=1 // pred_check_branch
      %29 = sbr.rel (0) target = $region33
    $region32: #{tpu_custom_call.1} parent=1 // pred_region
      _
    $region33: #{tpu_custom_call.1} parent=1 // pred_fallthru
      _
    %31 = vst [vmem:[#allocation2] sm:$0xff] 0.0
    %32 = vst [vmem:[#allocation2 + $0x18] sm:$0xff] 0.0
    %v33 = vld [vmem:[%s0] ss:$2 sm:$0xf]
    %s34 = scalar_lea.vmem %s0, 1
    %v35 = vld [vmem:[%s34] ss:$2 sm:$0xf]
    %v36 = vld [vmem:[%s1] sm:$0xff]
    %v37 = vld [vmem:[%s1 + $0x8] sm:$0xff]
    %38 = vst [vmem:[#allocation2 + $0x8] sm:$0xff] %v36
    %39 = vst [vmem:[#allocation2 + $0x10] sm:$0xff] %v37
    %v40 = vld [vmem:[#allocation2] sm:$0xff]
    %v41 = vld [vmem:[#allocation2 + $0x8] sm:$0xff]
    %v42 = vld [vmem:[#allocation2 + $0x10] sm:$0xff]
    %v43 = vld [vmem:[#allocation2 + $0x18] sm:$0xff]
    %v45 = vlaneseq
    %v46 = vshrl.u32 %v45, 7
    %v47 = vsub.s32 0, %v46
    %v48 = vrot.slane %v33, %v47
    %v49 = vlaneseq
    %v50 = vshrl.u32 %v49, 7
    %v51 = vsub.s32 1, %v50
    %v52 = vrot.slane %v33, %v51
    %v53 = vlaneseq
    %v54 = vshrl.u32 %v53, 7
    %v55 = vsub.s32 2, %v54
    %v56 = vrot.slane %v33, %v55
    %v57 = vlaneseq
    %v58 = vshrl.u32 %v57, 7
    %v59 = vsub.s32 3, %v58
    %v60 = vrot.slane %v33, %v59
    %v65 = vmul.f32 %v40, %v48
    %v66 = vmul.f32 %v41, %v52
    %v67 = vmul.f32 %v42, %v56
    %v68 = vmul.f32 %v43, %v60
    %v70 = vlaneseq
    %v71 = vshrl.u32 %v70, 7
    %v72 = vsub.s32 0, %v71
    %v73 = vrot.slane %v35, %v72
    %v74 = vlaneseq
    %v75 = vshrl.u32 %v74, 7
    %v76 = vsub.s32 1, %v75
    %v77 = vrot.slane %v35, %v76
    %v78 = vlaneseq
    %v79 = vshrl.u32 %v78, 7
    %v80 = vsub.s32 2, %v79
    %v81 = vrot.slane %v35, %v80
    %v82 = vlaneseq
    %v83 = vshrl.u32 %v82, 7
    %v84 = vsub.s32 3, %v83
    %v85 = vrot.slane %v35, %v84
    %v90 = vmul.f32 %v40, %v73
    %v91 = vmul.f32 %v41, %v77
    %v92 = vmul.f32 %v42, %v81
    %v93 = vmul.f32 %v43, %v85
    %97 = vrot.lane.b32.xlu0 %v40, 127
    %v98 = vpop.permute.xlu0 %97
    %99 = vrot.lane.b32.xlu0 %v41, 127
    %v100 = vpop.permute.xlu0 %99
    %101 = vrot.lane.b32.xlu0 %v42, 127
    %v102 = vpop.permute.xlu0 %101
    %vm103 = vcmask 1039360
    %v104 = vsel %vm103, %v98, %v100
    %v105 = vsel %vm103, %v100, %v102
    %112 = vrot.lane.b32.xlu0 %v90, 126
    %v113 = vpop.permute.xlu0 %112
    %114 = vrot.lane.b32.xlu0 %v91, 126
    %v115 = vpop.permute.xlu0 %114
    %116 = vrot.lane.b32.xlu0 %v92, 126
    %v117 = vpop.permute.xlu0 %116
    %vm118 = vcmask 1031168
    %v119 = vsel %vm118, %v113, %v115
    %v120 = vsel %vm118, %v115, %v117
    %127 = vrot.lane.b32.xlu0 %v65, 112
    %v128 = vpop.permute.xlu0 %127
    %129 = vrot.lane.b32.xlu0 %v66, 112
    %v130 = vpop.permute.xlu0 %129
    %131 = vrot.lane.b32.xlu0 %v67, 112
    %v132 = vpop.permute.xlu0 %131
    %vm133 = vcmask 916480
    %v134 = vsel %vm133, %v128, %v130
    %v135 = vsel %vm133, %v130, %v132
    %139 = vrot.lane.b32.xlu0 %v41, 111
    %v140 = vpop.permute.xlu0 %139
    %141 = vrot.lane.b32.xlu0 %v42, 111
    %v142 = vpop.permute.xlu0 %141
    %vm143 = vcmask 908288
    %v144 = vsel %vm143, %v140, %v142
    %149 = vrot.lane.b32.xlu0 %v91, 110
    %v150 = vpop.permute.xlu0 %149
    %151 = vrot.lane.b32.xlu0 %v92, 110
    %v152 = vpop.permute.xlu0 %151
    %153 = vrot.lane.b32.xlu0 %v93, 110
    %v154 = vpop.permute.xlu0 %153
    %vm155 = vcmask 900096
    %v156 = vsel %vm155, %v150, %v152
    %v157 = vsel %vm155, %v152, %v154
    %162 = vrot.lane.b32.xlu0 %v66, 96
    %v163 = vpop.permute.xlu0 %162
    %164 = vrot.lane.b32.xlu0 %v67, 96
    %v165 = vpop.permute.xlu0 %164
    %166 = vrot.lane.b32.xlu0 %v68, 96
    %v167 = vpop.permute.xlu0 %166
    %vm168 = vcmask 785408
    %v169 = vsel %vm168, %v163, %v165
    %v170 = vsel %vm168, %v165, %v167
    %175 = vrot.lane.b32.xlu0 %v41, 95
    %v176 = vpop.permute.xlu0 %175
    %177 = vrot.lane.b32.xlu0 %v42, 95
    %v178 = vpop.permute.xlu0 %177
    %179 = vrot.lane.b32.xlu0 %v43, 95
    %v180 = vpop.permute.xlu0 %179
    %vm181 = vcmask 777216
    %v182 = vsel %vm181, %v176, %v178
    %v183 = vsel %vm181, %v178, %v180
    %187 = vrot.lane.b32.xlu0 %v91, 94
    %v188 = vpop.permute.xlu0 %187
    %189 = vrot.lane.b32.xlu0 %v92, 94
    %v190 = vpop.permute.xlu0 %189
    %191 = vrot.lane.b32.xlu0 %v93, 94
    %v192 = vpop.permute.xlu0 %191
    %vm193 = vcmask 769024
    %v194 = vsel %vm193, %v188, %v190
    %v195 = vsel %vm193, %v190, %v192
    %v199 = vpack.c.bf16 %v104, %v65
    %v200 = vpack.c.bf16 %v105, %v66
    %v201 = vpack.c.bf16 %v102, %v67
    %v202 = vpack.c.bf16 %v134, %v119
    %v203 = vpack.c.bf16 %v135, %v120
    %v204 = vpack.c.bf16 %v132, %v117
    %v205 = vpack.c.bf16 %v150, %v140
    %v206 = vpack.c.bf16 %v156, %v144
    %v207 = vpack.c.bf16 %v157, %v142
    %v208 = vpack.c.bf16 %v176, %v163
    %v209 = vpack.c.bf16 %v182, %v169
    %v210 = vpack.c.bf16 %v183, %v170
    %v211 = vpack.c.bf16 %v188, %v188
    %v212 = vpack.c.bf16 %v194, %v194
    %v213 = vpack.c.bf16 %v195, %v195
    %v214 = vld [vmem:[%s2] sm:$0xf]
    %230 = vrot.lane.b32.xlu0 %v199, 17
    %v231 = vpop.permute.xlu0 %230
    %232 = vrot.lane.b32.xlu0 %v200, 17
    %v233 = vpop.permute.xlu0 %232
    %234 = vrot.lane.b32.xlu0 %v201, 17
    %v235 = vpop.permute.xlu0 %234
    %236 = vrot.lane.b32.xlu0 %v202, 17
    %v237 = vpop.permute.xlu0 %236
    %238 = vrot.lane.b32.xlu0 %v203, 17
    %v239 = vpop.permute.xlu0 %238
    %240 = vrot.lane.b32.xlu0 %v204, 17
    %v241 = vpop.permute.xlu0 %240
    %242 = vrot.lane.b32.xlu0 %v205, 17
    %v243 = vpop.permute.xlu0 %242
    %244 = vrot.lane.b32.xlu0 %v206, 17
    %v245 = vpop.permute.xlu0 %244
    %246 = vrot.lane.b32.xlu0 %v207, 17
    %v247 = vpop.permute.xlu0 %246
    %248 = vrot.lane.b32.xlu0 %v208, 17
    %v249 = vpop.permute.xlu0 %248
    %250 = vrot.lane.b32.xlu0 %v209, 17
    %v251 = vpop.permute.xlu0 %250
    %252 = vrot.lane.b32.xlu0 %v210, 17
    %v253 = vpop.permute.xlu0 %252
    %254 = vrot.lane.b32.xlu0 %v211, 17
    %v255 = vpop.permute.xlu0 %254
    %256 = vrot.lane.b32.xlu0 %v212, 17
    %v257 = vpop.permute.xlu0 %256
    %258 = vrot.lane.b32.xlu0 %v213, 17
    %v259 = vpop.permute.xlu0 %258
    %vm260 = vcmask 138240
    %v261 = vsel %vm260, %v231, %v233
    %v262 = vsel %vm260, %v233, %v235
    %v263 = vsel %vm260, %v237, %v239
    %v264 = vsel %vm260, %v239, %v241
    %v265 = vsel %vm260, %v243, %v245
    %v266 = vsel %vm260, %v245, %v247
    %v267 = vsel %vm260, %v249, %v251
    %v268 = vsel %vm260, %v251, %v253
    %v269 = vsel %vm260, %v255, %v257
    %v270 = vsel %vm260, %v257, %v259
    %vm279 = vcmask 588800
    %v281 = vsel %vm279, %v214, 0
    %vm283 = vcmask 1043456
    %v285 = vsel %vm283, %v269, 0
    %v288 = vsel %vm283, %v270, 0
    %290 = vmatprep.subr.bf16.mxu0 %v262
    %291 = vmatpush1.bf16.msra.mxu0 %v261
    %292 = vmatprep.subr.bf16.mxu0 %v264
    %293 = vmatpush1.bf16.msra.mxu0 %v263
    %294 = vmatprep.subr.bf16.mxu0 %v266
    %295 = vmatpush1.bf16.msra.mxu0 %v265
    %296 = vmatprep.subr.bf16.mxu0 %v268
    %297 = vmatpush1.bf16.msra.mxu0 %v267
    %298 = vmatprep.subr.bf16.mxu0 %v288
    %299 = vmatpush1.bf16.msra.mxu0 %v285
    %300 = vmatprep.subr.bf16.mxu0 0
    %301 = vmatpush1.bf16.msra.mxu0 0
    %302 = vmatprep.subr.bf16.mxu0 0
    %303 = vmatpush1.bf16.msra.mxu0 0
    %304 = vmatprep.subr.bf16.mxu0 0
    %305 = vmatpush1.bf16.msra.mxu0 0
    %306 = vmatprep.subr.bf16.mxu0 0
    %307 = vmatpush1.bf16.msra.mxu0 0
    %308 = vmatprep.subr.bf16.mxu0 0
    %309 = vmatpush1.bf16.msra.mxu0 0
    %310 = vmatprep.subr.bf16.mxu0 0
    %311 = vmatpush1.bf16.msra.mxu0 0
    %312 = vmatprep.subr.bf16.mxu0 0
    %313 = vmatpush1.bf16.msra.mxu0 0
    %314 = vmatprep.subr.bf16.mxu0 0
    %315 = vmatpush1.bf16.msra.mxu0 0
    %316 = vmatprep.subr.bf16.mxu0 0
    %317 = vmatpush1.bf16.msra.mxu0 0
    %318 = vmatprep.subr.bf16.mxu0 0
    %319 = vmatpush1.bf16.msra.mxu0 0
    %320 = vmatprep.subr.bf16.mxu0 0
    %321 = vmatpush1.bf16.msra.mxu0 0
    %322 = vmatprep.mubr.bf16.mxu0 0
    %323 = vmatmul.mubr.bf16.gmra.mrb[0].mxu0 %v281
    %v324 = vpop.f32.mrb[0].mxu0
    %v325 = vadd.f32 0.0, %v324
    %v326 = vpop.f32.mrb[0].mxu0
    %v327 = vadd.f32 0.0, %v326
    %v328 = vpop.f32.mrb[0].mxu0
    %v329 = vpop.f32.mrb[0].mxu0
    %330 = vdwg.mxu0
    %v331 = vadd.f32 %v325, %v327
    %332 = vadd.xlane.f32.xlu0 %v331
    %v333 = vpop.xlane.xlu0 %332
    %v334 = vrcp.pop 256.0
    %v335 = vmul.f32 %v333, %v334
    %v336 = vsub.f32 %v325, %v335
    %v337 = vsub.f32 %v327, %v335
    %v338 = vmul.f32 %v336, %v336
    %v339 = vmul.f32 %v337, %v337
    %v340 = vadd.f32 %v338, %v339
    %341 = vadd.xlane.f32.xlu0 %v340
    %v342 = vpop.xlane.xlu0 %341
    %v343 = vmul.f32 %v342, %v334
    %v344 = vadd.f32 %v343, 1e-05
    %v345 = vrsqrt.pop %v344
    %v346 = vld [vmem:[%s3] sm:$0xff]
    %v347 = vmul.f32 %v345, %v346
    %349 = vset.pattern.permute.xlu0 0
    %350 = vperm.xlu0 %349, %v347
    %v351 = vpop.permute.xlu0 %350
    %v353 = vmul.f32 %v336, %v351
    %v354 = vmul.f32 %v337, %v351
    %v355 = vld [vmem:[%s4] sm:$0xff]
    %357 = vset.pattern.permute.xlu0 0
    %358 = vperm.xlu0 %357, %v355
    %v359 = vpop.permute.xlu0 %358
    %v361 = vadd.f32 %v353, %v359
    %v362 = vadd.f32 %v354, %v359
    %vm363 = vcmp.ge.f32.partialorder %v361, 0.0
    %vm364 = vcmp.ge.f32.partialorder %v362, 0.0
    %v365 = vmul.f32 %v361, 0.01
    %v366 = vmul.f32 %v362, 0.01
    %v367 = vsel %vm363, %v361, %v365
    %v368 = vsel %vm364, %v362, %v366
    %369 = vst [vmem:[#allocation2 + $0x8] sm:$0xff] %v367
    %370 = vst [vmem:[#allocation2 + $0x10] sm:$0xff] %v368
    %v371 = vld [vmem:[#allocation2] sm:$0xff]
    %v372 = vld [vmem:[#allocation2 + $0x8] sm:$0xff]
    %v373 = vld [vmem:[#allocation2 + $0x10] sm:$0xff]
    %v374 = vld [vmem:[#allocation2 + $0x18] sm:$0xff]
    %v375 = vmul.f32 %v371, %v48
    %v376 = vmul.f32 %v372, %v52
    %v377 = vmul.f32 %v373, %v56
    %v378 = vmul.f32 %v374, %v60
    %v379 = vmul.f32 %v371, %v73
    %v380 = vmul.f32 %v372, %v77
    %v381 = vmul.f32 %v373, %v81
    %v382 = vmul.f32 %v374, %v85
    %386 = vrot.lane.b32.xlu0 %v371, 127
    %v387 = vpop.permute.xlu0 %386
    %388 = vrot.lane.b32.xlu0 %v372, 127
    %v389 = vpop.permute.xlu0 %388
    %390 = vrot.lane.b32.xlu0 %v373, 127
    %v391 = vpop.permute.xlu0 %390
    %v392 = vsel %vm103, %v387, %v389
    %v393 = vsel %vm103, %v389, %v391
    %400 = vrot.lane.b32.xlu0 %v379, 126
    %v401 = vpop.permute.xlu0 %400
    %402 = vrot.lane.b32.xlu0 %v380, 126
    %v403 = vpop.permute.xlu0 %402
    %404 = vrot.lane.b32.xlu0 %v381, 126
    %v405 = vpop.permute.xlu0 %404
    %v406 = vsel %vm118, %v401, %v403
    %v407 = vsel %vm118, %v403, %v405
    %414 = vrot.lane.b32.xlu0 %v375, 112
    %v415 = vpop.permute.xlu0 %414
    %416 = vrot.lane.b32.xlu0 %v376, 112
    %v417 = vpop.permute.xlu0 %416
    %418 = vrot.lane.b32.xlu0 %v377, 112
    %v419 = vpop.permute.xlu0 %418
    %v420 = vsel %vm133, %v415, %v417
    %v421 = vsel %vm133, %v417, %v419
    %425 = vrot.lane.b32.xlu0 %v372, 111
    %v426 = vpop.permute.xlu0 %425
    %427 = vrot.lane.b32.xlu0 %v373, 111
    %v428 = vpop.permute.xlu0 %427
    %v429 = vsel %vm143, %v426, %v428
    %434 = vrot.lane.b32.xlu0 %v380, 110
    %v435 = vpop.permute.xlu0 %434
    %436 = vrot.lane.b32.xlu0 %v381, 110
    %v437 = vpop.permute.xlu0 %436
    %438 = vrot.lane.b32.xlu0 %v382, 110
    %v439 = vpop.permute.xlu0 %438
    %v440 = vsel %vm155, %v435, %v437
    %v441 = vsel %vm155, %v437, %v439
    %446 = vrot.lane.b32.xlu0 %v376, 96
    %v447 = vpop.permute.xlu0 %446
    %448 = vrot.lane.b32.xlu0 %v377, 96
    %v449 = vpop.permute.xlu0 %448
    %450 = vrot.lane.b32.xlu0 %v378, 96
    %v451 = vpop.permute.xlu0 %450
    %v452 = vsel %vm168, %v447, %v449
    %v453 = vsel %vm168, %v449, %v451
    %458 = vrot.lane.b32.xlu0 %v372, 95
    %v459 = vpop.permute.xlu0 %458
    %460 = vrot.lane.b32.xlu0 %v373, 95
    %v461 = vpop.permute.xlu0 %460
    %462 = vrot.lane.b32.xlu0 %v374, 95
    %v463 = vpop.permute.xlu0 %462
    %v464 = vsel %vm181, %v459, %v461
    %v465 = vsel %vm181, %v461, %v463
    %469 = vrot.lane.b32.xlu0 %v380, 94
    %v470 = vpop.permute.xlu0 %469
    %471 = vrot.lane.b32.xlu0 %v381, 94
    %v472 = vpop.permute.xlu0 %471
    %473 = vrot.lane.b32.xlu0 %v382, 94
    %v474 = vpop.permute.xlu0 %473
    %v475 = vsel %vm193, %v470, %v472
    %v476 = vsel %vm193, %v472, %v474
    %v480 = vpack.c.bf16 %v392, %v375
    %v481 = vpack.c.bf16 %v393, %v376
    %v482 = vpack.c.bf16 %v391, %v377
    %v483 = vpack.c.bf16 %v420, %v406
    %v484 = vpack.c.bf16 %v421, %v407
    %v485 = vpack.c.bf16 %v419, %v405
    %v486 = vpack.c.bf16 %v435, %v426
    %v487 = vpack.c.bf16 %v440, %v429
    %v488 = vpack.c.bf16 %v441, %v428
    %v489 = vpack.c.bf16 %v459, %v447
    %v490 = vpack.c.bf16 %v464, %v452
    %v491 = vpack.c.bf16 %v465, %v453
    %v492 = vpack.c.bf16 %v470, %v470
    %v493 = vpack.c.bf16 %v475, %v475
    %v494 = vpack.c.bf16 %v476, %v476
    %v495 = vld [vmem:[%s5] sm:$0xf]
    %511 = vrot.lane.b32.xlu0 %v480, 17
    %v512 = vpop.permute.xlu0 %511
    %513 = vrot.lane.b32.xlu0 %v481, 17
    %v514 = vpop.permute.xlu0 %513
    %515 = vrot.lane.b32.xlu0 %v482, 17
    %v516 = vpop.permute.xlu0 %515
    %517 = vrot.lane.b32.xlu0 %v483, 17
    %v518 = vpop.permute.xlu0 %517
    %519 = vrot.lane.b32.xlu0 %v484, 17
    %v520 = vpop.permute.xlu0 %519
    %521 = vrot.lane.b32.xlu0 %v485, 17
    %v522 = vpop.permute.xlu0 %521
    %523 = vrot.lane.b32.xlu0 %v486, 17
    %v524 = vpop.permute.xlu0 %523
    %525 = vrot.lane.b32.xlu0 %v487, 17
    %v526 = vpop.permute.xlu0 %525
    %527 = vrot.lane.b32.xlu0 %v488, 17
    %v528 = vpop.permute.xlu0 %527
    %529 = vrot.lane.b32.xlu0 %v489, 17
    %v530 = vpop.permute.xlu0 %529
    %531 = vrot.lane.b32.xlu0 %v490, 17
    %v532 = vpop.permute.xlu0 %531
    %533 = vrot.lane.b32.xlu0 %v491, 17
    %v534 = vpop.permute.xlu0 %533
    %535 = vrot.lane.b32.xlu0 %v492, 17
    %v536 = vpop.permute.xlu0 %535
    %537 = vrot.lane.b32.xlu0 %v493, 17
    %v538 = vpop.permute.xlu0 %537
    %539 = vrot.lane.b32.xlu0 %v494, 17
    %v540 = vpop.permute.xlu0 %539
    %v541 = vsel %vm260, %v512, %v514
    %v542 = vsel %vm260, %v514, %v516
    %v543 = vsel %vm260, %v518, %v520
    %v544 = vsel %vm260, %v520, %v522
    %v545 = vsel %vm260, %v524, %v526
    %v546 = vsel %vm260, %v526, %v528
    %v547 = vsel %vm260, %v530, %v532
    %v548 = vsel %vm260, %v532, %v534
    %v549 = vsel %vm260, %v536, %v538
    %v550 = vsel %vm260, %v538, %v540
    %v560 = vsel %vm279, %v495, 0
    %v563 = vsel %vm283, %v549, 0
    %v566 = vsel %vm283, %v550, 0
    %568 = vmatprep.subr.bf16.mxu0 %v542
    %569 = vmatpush1.bf16.msra.mxu0 %v541
    %570 = vmatprep.subr.bf16.mxu0 %v544
    %571 = vmatpush1.bf16.msra.mxu0 %v543
    %572 = vmatprep.subr.bf16.mxu0 %v546
    %573 = vmatpush1.bf16.msra.mxu0 %v545
    %574 = vmatprep.subr.bf16.mxu0 %v548
    %575 = vmatpush1.bf16.msra.mxu0 %v547
    %576 = vmatprep.subr.bf16.mxu0 %v566
    %577 = vmatpush1.bf16.msra.mxu0 %v563
    %578 = vmatprep.subr.bf16.mxu0 0
    %579 = vmatpush1.bf16.msra.mxu0 0
    %580 = vmatprep.subr.bf16.mxu0 0
    %581 = vmatpush1.bf16.msra.mxu0 0
    %582 = vmatprep.subr.bf16.mxu0 0
    %583 = vmatpush1.bf16.msra.mxu0 0
    %584 = vmatprep.subr.bf16.mxu0 0
    %585 = vmatpush1.bf16.msra.mxu0 0
    %586 = vmatprep.subr.bf16.mxu0 0
    %587 = vmatpush1.bf16.msra.mxu0 0
    %588 = vmatprep.subr.bf16.mxu0 0
    %589 = vmatpush1.bf16.msra.mxu0 0
    %590 = vmatprep.subr.bf16.mxu0 0
    %591 = vmatpush1.bf16.msra.mxu0 0
    %592 = vmatprep.subr.bf16.mxu0 0
    %593 = vmatpush1.bf16.msra.mxu0 0
    %594 = vmatprep.subr.bf16.mxu0 0
    %595 = vmatpush1.bf16.msra.mxu0 0
    %596 = vmatprep.subr.bf16.mxu0 0
    %597 = vmatpush1.bf16.msra.mxu0 0
    %598 = vmatprep.subr.bf16.mxu0 0
    %599 = vmatpush1.bf16.msra.mxu0 0
    %600 = vmatprep.mubr.bf16.mxu0 0
    %601 = vmatmul.mubr.bf16.gmra.mrb[0].mxu0 %v560
    %v602 = vpop.f32.mrb[0].mxu0
    %v603 = vadd.f32 0.0, %v602
    %v604 = vpop.f32.mrb[0].mxu0
    %v605 = vadd.f32 0.0, %v604
    %v606 = vpop.f32.mrb[0].mxu0
    %v607 = vpop.f32.mrb[0].mxu0
    %608 = vdwg.mxu0
    %v609 = vadd.f32 %v603, %v605
    %610 = vadd.xlane.f32.xlu0 %v609
    %v611 = vpop.xlane.xlu0 %610
    %v612 = vmul.f32 %v611, %v334
    %v613 = vsub.f32 %v603, %v612
    %v614 = vsub.f32 %v605, %v612
    %v615 = vmul.f32 %v613, %v613
    %v616 = vmul.f32 %v614, %v614
    %v617 = vadd.f32 %v615, %v616
    %618 = vadd.xlane.f32.xlu0 %v617
    %v619 = vpop.xlane.xlu0 %618
    %v620 = vmul.f32 %v619, %v334
    %v621 = vadd.f32 %v620, 1e-05
    %v622 = vrsqrt.pop %v621
    %v623 = vld [vmem:[%s6] sm:$0xff]
    %v624 = vmul.f32 %v622, %v623
    %626 = vset.pattern.permute.xlu0 0
    %627 = vperm.xlu0 %626, %v624
    %v628 = vpop.permute.xlu0 %627
    %v630 = vmul.f32 %v613, %v628
    %v631 = vmul.f32 %v614, %v628
    %v632 = vld [vmem:[%s7] sm:$0xff]
    %634 = vset.pattern.permute.xlu0 0
    %635 = vperm.xlu0 %634, %v632
    %v636 = vpop.permute.xlu0 %635
    %v638 = vadd.f32 %v630, %v636
    %v639 = vadd.f32 %v631, %v636
    %v640 = vld [vmem:[%s1] sm:$0xff]
    %v641 = vld [vmem:[%s1 + $0x8] sm:$0xff]
    %v642 = vadd.f32 %v640, %v638
    %v643 = vadd.f32 %v641, %v639
    %644 = vst [vmem:[#allocation3] sm:$0xff] %v642
    %645 = vst [vmem:[#allocation3 + $0x8] sm:$0xff] %v643
    // Predicated region
    $region34: #{tpu_custom_call.1} parent=1 // pred_check
      _
    $region35: #{tpu_custom_call.1} parent=1 // pred_check_branch
      %647 = sbr.rel (0) target = $region37
    $region36: #{tpu_custom_call.1} parent=1 // pred_region
      %s649 = ssub.s32 256, 256
      %650 = vsyncadd [#allocation4], %s649
      %s652 = sshll.u32 [#allocation3], 4
      %s653 = int_to_ptr.vmem [resolvable:$true] %s652
      %655 = dma.vmem_to_hbm [thread:$0]  %s653, 256, %s8, [#allocation4]
    $region37: #{tpu_custom_call.1} parent=1 // pred_fallthru
      _
    // Predicated region
    $region38: #{tpu_custom_call.1} parent=1 // pred_check
      _
    $region39: #{tpu_custom_call.1} parent=1 // pred_check_branch
      %657 = sbr.rel (0) target = $region41
    $region40: #{tpu_custom_call.1} parent=1 // pred_region
      %658 = dma.done [#allocation4], 256
    $region41: #{tpu_custom_call.1} parent=1 // pred_fallthru
      _
    %659 = vsyncpa [#allocation4], 1

</llo_original>
